<compile_context>
chip_gen: v7x
topology: tpu7x:2x2x1
jax: 0.10.0
libtpu: 0.0.40
codegen_flags: <defaults>
</compile_context>

<pallas_src>
import functools

import jax
import jax.numpy as jnp
from jax.experimental import pallas as pl
from jax.experimental.pallas import tpu as pltpu

KS = 7            # kernel_size=7 in the PyTorch module
PAD = KS // 2     # 'same' padding


def sa_kernel(x_ref, w_ref, col_ref, row_ref, o_ref, *, H, W):
    # x_ref   : (C, H*W) VMEM block for the current batch element
    # w_ref   : (2*KS*KS,) SMEM conv weights, layout [in_ch, kh, kw]
    # col_ref : (1, H*W) int32  column index j of each flattened position
    # row_ref : (1, H*W) int32  row    index i of each flattened position
    # o_ref   : (C, H*W) VMEM output block
    C, HW = x_ref.shape

    # ---- Pass 1: streaming channel reduction (mean & max) ------------------
    x0 = x_ref[pl.ds(0, 1), :].astype(jnp.float32)                 # (1, HW)

    def _reduce(c, carry):
        s, m = carry
        xc = x_ref[pl.ds(c, 1), :].astype(jnp.float32)
        return s + xc, jnp.maximum(m, xc)

    csum, cmax = jax.lax.fori_loop(1, C, _reduce, (x0, x0))
    cavg = csum * (1.0 / C)

    # ---- 7x7 'same' conv on the 2-channel (avg, max) map, flat layout ------
    col = col_ref[...]                                             # (1, HW)
    row = row_ref[...]
    col_ok = {}
    row_ok = {}
    for d in range(-PAD, PAD + 1):
        if d == 0:
            continue
        cd = col + d
        rd = row + d
        col_ok[d] = jnp.logical_and(cd >= 0, cd < W)
        row_ok[d] = jnp.logical_and(rd >= 0, rd < H)

    def lane_shift(v, d):
        # out[k] = v[k + d], zeroed where source column j+d is out of range.
        if d == 0:
            return v
        shifted = pltpu.roll(v, (-d) % HW, 1)                      # XLU rotate
        return jnp.where(col_ok[d], shifted, 0.0)

    def row_shift(v, d):
        # out[k] = v[k + d*W], zeroed where source row i+d is out of range.
        if d == 0:
            return v
        shifted = pltpu.roll(v, (-d * W) % HW, 1)                  # XLU rotate
        return jnp.where(row_ok[d], shifted, 0.0)

    # 4 independent partial accumulators for VALU ILP.
    accs = [jnp.zeros((1, HW), jnp.float32) for _ in range(4)]
    n = 0
    for c, fmap in enumerate((cavg, cmax)):
        # Column-shifted copies, reused across all 7 row offsets.
        cols = [lane_shift(fmap, dj - PAD) for dj in range(KS)]
        for di in range(KS):
            g = None
            for dj in range(KS):
                wv = w_ref[c * KS * KS + di * KS + dj]             # SMEM scalar
                term = cols[dj] * wv
                g = term if g is None else g + term
            accs[n % 4] = accs[n % 4] + row_shift(g, di - PAD)
            n += 1
    conv = (accs[0] + accs[1]) + (accs[2] + accs[3])               # (1, HW)

    # sigmoid: exp on the EUP, reciprocal instead of a VALU divide.
    att = pl.reciprocal(1.0 + jnp.exp(-conv))                      # (1, HW)

    # ---- Pass 2: streaming per-channel modulation ---------------------------
    def _modulate(c, carry):
        xc = x_ref[pl.ds(c, 1), :].astype(jnp.float32)
        o_ref[pl.ds(c, 1), :] = (xc * att).astype(o_ref.dtype)
        return carry

    jax.lax.fori_loop(0, C, _modulate, 0)


def spatial_attention(x, w_flat):
    """x: (B, C, H, W) float32; w_flat: (2*KS*KS,) conv weights (OIHW, O=1)."""
    B, C, H, W = x.shape
    HW = H * W
    x_flat = x.reshape(B, C, HW)           # lane-dense layout for the kernel

    # Host-precomputed row/col index of every flattened spatial position.
    ids = jnp.arange(HW, dtype=jnp.int32)
    col_ids = (ids % W).reshape(1, HW)
    row_ids = (ids // W).reshape(1, HW)

    kernel = functools.partial(sa_kernel, H=H, W=W)
    out_flat = pl.pallas_call(
        kernel,
        out_shape=jax.ShapeDtypeStruct((B, C, HW), x.dtype),
        grid_spec=pltpu.PrefetchScalarGridSpec(
            num_scalar_prefetch=0,
            grid=(B,),
            in_specs=[
                pl.BlockSpec((None, C, HW), lambda b: (b, 0, 0)),
                pl.BlockSpec(memory_space=pltpu.MemorySpace.SMEM),
                pl.BlockSpec((1, HW), lambda b: (0, 0)),
                pl.BlockSpec((1, HW), lambda b: (0, 0)),
            ],
            out_specs=pl.BlockSpec((None, C, HW), lambda b: (b, 0, 0)),
        ),
        compiler_params=pltpu.CompilerParams(
            dimension_semantics=("parallel",)),
    )(x_flat, w_flat, col_ids, row_ids)
    return out_flat.reshape(B, C, H, W)


def sa_reference(x, w_flat):
    """Pure-JAX reference mirroring the PyTorch forward."""
    avg = jnp.mean(x, axis=1, keepdims=True)
    mx = jnp.max(x, axis=1, keepdims=True)
    m = jnp.concatenate([avg, mx], axis=1)                # (B, 2, H, W)
    w = w_flat.reshape(1, 2, KS, KS)                      # OIHW
    conv = jax.lax.conv_general_dilated(
        m, w, window_strides=(1, 1), padding="SAME",
        dimension_numbers=("NCHW", "OIHW", "NCHW"))
    return x * jax.nn.sigmoid(conv)


if __name__ == "__main__":
    key = jax.random.PRNGKey(0)
    kx, kw = jax.random.split(key)

    B, C, H, W = 2, 4, 16, 16
    x = jax.random.normal(kx, (B, C, H, W), dtype=jnp.float32)

    # Deterministic conv weight, PyTorch shape (out=1, in=2, 7, 7), no bias.
    fan_in = 2 * KS * KS
    bound = 1.0 / (fan_in ** 0.5)
    w = jax.random.uniform(kw, (1, 2, KS, KS), dtype=jnp.float32,
                           minval=-bound, maxval=bound)
    w_flat = w.reshape(-1)

    out = spatial_attention(x, w_flat)
    out = jax.block_until_ready(out)

    ref = sa_reference(x, w_flat)
    assert out.shape == (B, C, H, W)
    assert jnp.allclose(out, ref, atol=1e-5, rtol=1e-5), (
        float(jnp.max(jnp.abs(out - ref))))

    print("KERNEL_OK")
</pallas_src>

<mosaic_0001>
module attributes {stable_mosaic.version = 11 : i64} {
  func.func @sa_kernel(%arg0: i32, %arg1: memref<1x4x256xf32, #tpu.memory_space<vmem>>, %arg2: memref<98xf32, #tpu.memory_space<smem>>, %arg3: memref<1x256xi32, #tpu.memory_space<vmem>>, %arg4: memref<1x256xi32, #tpu.memory_space<vmem>>, %arg5: memref<1x4x256xf32, #tpu.memory_space<vmem>>) attributes {dimension_semantics = [#tpu.dimension_semantics<parallel>], iteration_bounds = array<i64: 2>, scalar_prefetch = 0 : i64, scratch_operands = 0 : i64, tpu.core_type = #tpu.core_type<tc>, window_params = [{transform_indices = @transform_0, window_bounds = array<i64: 1, 4, 256>}, {transform_indices = @transform_1, window_bounds = array<i64: 98>}, {pipeline_mode = #tpu.pipeline_mode<synchronous>, transform_indices = @transform_2, window_bounds = array<i64: 1, 256>}, {pipeline_mode = #tpu.pipeline_mode<synchronous>, transform_indices = @transform_3, window_bounds = array<i64: 1, 256>}, {transform_indices = @transform_4, window_bounds = array<i64: 1, 4, 256>}]} {
    %c0 = arith.constant 0 : index
    %c0_0 = arith.constant 0 : index
    %c0_1 = arith.constant 0 : index
    %0 = vector.load %arg1[%c0, %c0_0, %c0_1] : memref<1x4x256xf32, #tpu.memory_space<vmem>>, vector<1x1x256xf32>
    %1 = vector.shape_cast %0 : vector<1x1x256xf32> to vector<1x256xf32>
    %c1_i32 = arith.constant 1 : i32
    %c3_i32 = arith.constant 3 : i32
    %2 = arith.addi %c1_i32, %c3_i32 : i32
    %c1_i32_2 = arith.constant 1 : i32
    %3:2 = scf.for %arg6 = %c1_i32 to %2 step %c1_i32_2 iter_args(%arg7 = %1, %arg8 = %1) -> (vector<1x256xf32>, vector<1x256xf32>)  : i32 {
      %c0_88 = arith.constant 0 : index
      %570 = arith.index_cast %arg6 : i32 to index
      %c0_89 = arith.constant 0 : index
      %571 = vector.load %arg1[%c0_88, %570, %c0_89] : memref<1x4x256xf32, #tpu.memory_space<vmem>>, vector<1x1x256xf32>
      %572 = vector.shape_cast %571 : vector<1x1x256xf32> to vector<1x256xf32>
      %573 = arith.addf %arg7, %572 : vector<1x256xf32>
      %574 = arith.maximumf %arg8, %572 : vector<1x256xf32>
      scf.yield %573, %574 : vector<1x256xf32>, vector<1x256xf32>
    }
    %c3_i32_3 = arith.constant 3 : i32
    %cst = arith.constant 2.500000e-01 : f32
    %4 = vector.broadcast %cst : f32 to vector<1x256xf32>
    %5 = arith.mulf %3#0, %4 : vector<1x256xf32>
    %c0_4 = arith.constant 0 : index
    %c0_5 = arith.constant 0 : index
    %6 = vector.load %arg3[%c0_4, %c0_5] : memref<1x256xi32, #tpu.memory_space<vmem>>, vector<1x256xi32>
    %c0_6 = arith.constant 0 : index
    %c0_7 = arith.constant 0 : index
    %7 = vector.load %arg4[%c0_6, %c0_7] : memref<1x256xi32, #tpu.memory_space<vmem>>, vector<1x256xi32>
    %c-3_i32 = arith.constant -3 : i32
    %8 = vector.broadcast %c-3_i32 : i32 to vector<1x256xi32>
    %9 = arith.addi %6, %8 : vector<1x256xi32>
    %c-3_i32_8 = arith.constant -3 : i32
    %10 = vector.broadcast %c-3_i32_8 : i32 to vector<1x256xi32>
    %11 = arith.addi %7, %10 : vector<1x256xi32>
    %c0_i32 = arith.constant 0 : i32
    %12 = vector.broadcast %c0_i32 : i32 to vector<1x256xi32>
    %13 = arith.cmpi sge, %9, %12 : vector<1x256xi32>
    %c16_i32 = arith.constant 16 : i32
    %14 = vector.broadcast %c16_i32 : i32 to vector<1x256xi32>
    %15 = arith.cmpi slt, %9, %14 : vector<1x256xi32>
    %16 = arith.andi %13, %15 : vector<1x256xi1>
    %c0_i32_9 = arith.constant 0 : i32
    %17 = vector.broadcast %c0_i32_9 : i32 to vector<1x256xi32>
    %18 = arith.cmpi sge, %11, %17 : vector<1x256xi32>
    %c16_i32_10 = arith.constant 16 : i32
    %19 = vector.broadcast %c16_i32_10 : i32 to vector<1x256xi32>
    %20 = arith.cmpi slt, %11, %19 : vector<1x256xi32>
    %21 = arith.andi %18, %20 : vector<1x256xi1>
    %c-2_i32 = arith.constant -2 : i32
    %22 = vector.broadcast %c-2_i32 : i32 to vector<1x256xi32>
    %23 = arith.addi %6, %22 : vector<1x256xi32>
    %c-2_i32_11 = arith.constant -2 : i32
    %24 = vector.broadcast %c-2_i32_11 : i32 to vector<1x256xi32>
    %25 = arith.addi %7, %24 : vector<1x256xi32>
    %c0_i32_12 = arith.constant 0 : i32
    %26 = vector.broadcast %c0_i32_12 : i32 to vector<1x256xi32>
    %27 = arith.cmpi sge, %23, %26 : vector<1x256xi32>
    %c16_i32_13 = arith.constant 16 : i32
    %28 = vector.broadcast %c16_i32_13 : i32 to vector<1x256xi32>
    %29 = arith.cmpi slt, %23, %28 : vector<1x256xi32>
    %30 = arith.andi %27, %29 : vector<1x256xi1>
    %c0_i32_14 = arith.constant 0 : i32
    %31 = vector.broadcast %c0_i32_14 : i32 to vector<1x256xi32>
    %32 = arith.cmpi sge, %25, %31 : vector<1x256xi32>
    %c16_i32_15 = arith.constant 16 : i32
    %33 = vector.broadcast %c16_i32_15 : i32 to vector<1x256xi32>
    %34 = arith.cmpi slt, %25, %33 : vector<1x256xi32>
    %35 = arith.andi %32, %34 : vector<1x256xi1>
    %c-1_i32 = arith.constant -1 : i32
    %36 = vector.broadcast %c-1_i32 : i32 to vector<1x256xi32>
    %37 = arith.addi %6, %36 : vector<1x256xi32>
    %c-1_i32_16 = arith.constant -1 : i32
    %38 = vector.broadcast %c-1_i32_16 : i32 to vector<1x256xi32>
    %39 = arith.addi %7, %38 : vector<1x256xi32>
    %c0_i32_17 = arith.constant 0 : i32
    %40 = vector.broadcast %c0_i32_17 : i32 to vector<1x256xi32>
    %41 = arith.cmpi sge, %37, %40 : vector<1x256xi32>
    %c16_i32_18 = arith.constant 16 : i32
    %42 = vector.broadcast %c16_i32_18 : i32 to vector<1x256xi32>
    %43 = arith.cmpi slt, %37, %42 : vector<1x256xi32>
    %44 = arith.andi %41, %43 : vector<1x256xi1>
    %c0_i32_19 = arith.constant 0 : i32
    %45 = vector.broadcast %c0_i32_19 : i32 to vector<1x256xi32>
    %46 = arith.cmpi sge, %39, %45 : vector<1x256xi32>
    %c16_i32_20 = arith.constant 16 : i32
    %47 = vector.broadcast %c16_i32_20 : i32 to vector<1x256xi32>
    %48 = arith.cmpi slt, %39, %47 : vector<1x256xi32>
    %49 = arith.andi %46, %48 : vector<1x256xi1>
    %c1_i32_21 = arith.constant 1 : i32
    %50 = vector.broadcast %c1_i32_21 : i32 to vector<1x256xi32>
    %51 = arith.addi %6, %50 : vector<1x256xi32>
    %c1_i32_22 = arith.constant 1 : i32
    %52 = vector.broadcast %c1_i32_22 : i32 to vector<1x256xi32>
    %53 = arith.addi %7, %52 : vector<1x256xi32>
    %c0_i32_23 = arith.constant 0 : i32
    %54 = vector.broadcast %c0_i32_23 : i32 to vector<1x256xi32>
    %55 = arith.cmpi sge, %51, %54 : vector<1x256xi32>
    %c16_i32_24 = arith.constant 16 : i32
    %56 = vector.broadcast %c16_i32_24 : i32 to vector<1x256xi32>
    %57 = arith.cmpi slt, %51, %56 : vector<1x256xi32>
    %58 = arith.andi %55, %57 : vector<1x256xi1>
    %c0_i32_25 = arith.constant 0 : i32
    %59 = vector.broadcast %c0_i32_25 : i32 to vector<1x256xi32>
    %60 = arith.cmpi sge, %53, %59 : vector<1x256xi32>
    %c16_i32_26 = arith.constant 16 : i32
    %61 = vector.broadcast %c16_i32_26 : i32 to vector<1x256xi32>
    %62 = arith.cmpi slt, %53, %61 : vector<1x256xi32>
    %63 = arith.andi %60, %62 : vector<1x256xi1>
    %c2_i32 = arith.constant 2 : i32
    %64 = vector.broadcast %c2_i32 : i32 to vector<1x256xi32>
    %65 = arith.addi %6, %64 : vector<1x256xi32>
    %c2_i32_27 = arith.constant 2 : i32
    %66 = vector.broadcast %c2_i32_27 : i32 to vector<1x256xi32>
    %67 = arith.addi %7, %66 : vector<1x256xi32>
    %c0_i32_28 = arith.constant 0 : i32
    %68 = vector.broadcast %c0_i32_28 : i32 to vector<1x256xi32>
    %69 = arith.cmpi sge, %65, %68 : vector<1x256xi32>
    %c16_i32_29 = arith.constant 16 : i32
    %70 = vector.broadcast %c16_i32_29 : i32 to vector<1x256xi32>
    %71 = arith.cmpi slt, %65, %70 : vector<1x256xi32>
    %72 = arith.andi %69, %71 : vector<1x256xi1>
    %c0_i32_30 = arith.constant 0 : i32
    %73 = vector.broadcast %c0_i32_30 : i32 to vector<1x256xi32>
    %74 = arith.cmpi sge, %67, %73 : vector<1x256xi32>
    %c16_i32_31 = arith.constant 16 : i32
    %75 = vector.broadcast %c16_i32_31 : i32 to vector<1x256xi32>
    %76 = arith.cmpi slt, %67, %75 : vector<1x256xi32>
    %77 = arith.andi %74, %76 : vector<1x256xi1>
    %c3_i32_32 = arith.constant 3 : i32
    %78 = vector.broadcast %c3_i32_32 : i32 to vector<1x256xi32>
    %79 = arith.addi %6, %78 : vector<1x256xi32>
    %c3_i32_33 = arith.constant 3 : i32
    %80 = vector.broadcast %c3_i32_33 : i32 to vector<1x256xi32>
    %81 = arith.addi %7, %80 : vector<1x256xi32>
    %c0_i32_34 = arith.constant 0 : i32
    %82 = vector.broadcast %c0_i32_34 : i32 to vector<1x256xi32>
    %83 = arith.cmpi sge, %79, %82 : vector<1x256xi32>
    %c16_i32_35 = arith.constant 16 : i32
    %84 = vector.broadcast %c16_i32_35 : i32 to vector<1x256xi32>
    %85 = arith.cmpi slt, %79, %84 : vector<1x256xi32>
    %86 = arith.andi %83, %85 : vector<1x256xi1>
    %c0_i32_36 = arith.constant 0 : i32
    %87 = vector.broadcast %c0_i32_36 : i32 to vector<1x256xi32>
    %88 = arith.cmpi sge, %81, %87 : vector<1x256xi32>
    %c16_i32_37 = arith.constant 16 : i32
    %89 = vector.broadcast %c16_i32_37 : i32 to vector<1x256xi32>
    %90 = arith.cmpi slt, %81, %89 : vector<1x256xi32>
    %91 = arith.andi %88, %90 : vector<1x256xi1>
    %cst_38 = arith.constant 0.000000e+00 : f32
    %92 = vector.broadcast %cst_38 : f32 to vector<1x256xf32>
    %cst_39 = arith.constant 0.000000e+00 : f32
    %93 = vector.broadcast %cst_39 : f32 to vector<1x256xf32>
    %cst_40 = arith.constant 0.000000e+00 : f32
    %94 = vector.broadcast %cst_40 : f32 to vector<1x256xf32>
    %cst_41 = arith.constant 0.000000e+00 : f32
    %95 = vector.broadcast %cst_41 : f32 to vector<1x256xf32>
    %c3_i32_42 = arith.constant 3 : i32
    %96 = tpu.dynamic_rotate %5 by %c3_i32_42 dim 1 : vector<1x256xf32>, i32 -> vector<1x256xf32>
    %cst_43 = arith.constant 0.000000e+00 : f32
    %97 = vector.broadcast %cst_43 : f32 to vector<1x256xf32>
    %98 = arith.select %16, %96, %97 : vector<1x256xi1>, vector<1x256xf32>
    %c2_i32_44 = arith.constant 2 : i32
    %99 = tpu.dynamic_rotate %5 by %c2_i32_44 dim 1 : vector<1x256xf32>, i32 -> vector<1x256xf32>
    %cst_45 = arith.constant 0.000000e+00 : f32
    %100 = vector.broadcast %cst_45 : f32 to vector<1x256xf32>
    %101 = arith.select %30, %99, %100 : vector<1x256xi1>, vector<1x256xf32>
    %c1_i32_46 = arith.constant 1 : i32
    %102 = tpu.dynamic_rotate %5 by %c1_i32_46 dim 1 : vector<1x256xf32>, i32 -> vector<1x256xf32>
    %cst_47 = arith.constant 0.000000e+00 : f32
    %103 = vector.broadcast %cst_47 : f32 to vector<1x256xf32>
    %104 = arith.select %44, %102, %103 : vector<1x256xi1>, vector<1x256xf32>
    %c255_i32 = arith.constant 255 : i32
    %105 = tpu.dynamic_rotate %5 by %c255_i32 dim 1 : vector<1x256xf32>, i32 -> vector<1x256xf32>
    %cst_48 = arith.constant 0.000000e+00 : f32
    %106 = vector.broadcast %cst_48 : f32 to vector<1x256xf32>
    %107 = arith.select %58, %105, %106 : vector<1x256xi1>, vector<1x256xf32>
    %c254_i32 = arith.constant 254 : i32
    %108 = tpu.dynamic_rotate %5 by %c254_i32 dim 1 : vector<1x256xf32>, i32 -> vector<1x256xf32>
    %cst_49 = arith.constant 0.000000e+00 : f32
    %109 = vector.broadcast %cst_49 : f32 to vector<1x256xf32>
    %110 = arith.select %72, %108, %109 : vector<1x256xi1>, vector<1x256xf32>
    %c253_i32 = arith.constant 253 : i32
    %111 = tpu.dynamic_rotate %5 by %c253_i32 dim 1 : vector<1x256xf32>, i32 -> vector<1x256xf32>
    %cst_50 = arith.constant 0.000000e+00 : f32
    %112 = vector.broadcast %cst_50 : f32 to vector<1x256xf32>
    %113 = arith.select %86, %111, %112 : vector<1x256xi1>, vector<1x256xf32>
    %c0_51 = arith.constant 0 : index
    %114 = memref.load %arg2[%c0_51] : memref<98xf32, #tpu.memory_space<smem>>
    %115 = vector.broadcast %114 : f32 to vector<1x256xf32>
    %116 = arith.mulf %98, %115 : vector<1x256xf32>
    %c1 = arith.constant 1 : index
    %117 = memref.load %arg2[%c1] : memref<98xf32, #tpu.memory_space<smem>>
    %118 = vector.broadcast %117 : f32 to vector<1x256xf32>
    %119 = arith.mulf %101, %118 : vector<1x256xf32>
    %120 = arith.addf %116, %119 : vector<1x256xf32>
    %c2 = arith.constant 2 : index
    %121 = memref.load %arg2[%c2] : memref<98xf32, #tpu.memory_space<smem>>
    %122 = vector.broadcast %121 : f32 to vector<1x256xf32>
    %123 = arith.mulf %104, %122 : vector<1x256xf32>
    %124 = arith.addf %120, %123 : vector<1x256xf32>
    %c3 = arith.constant 3 : index
    %125 = memref.load %arg2[%c3] : memref<98xf32, #tpu.memory_space<smem>>
    %126 = vector.broadcast %125 : f32 to vector<1x256xf32>
    %127 = arith.mulf %5, %126 : vector<1x256xf32>
    %128 = arith.addf %124, %127 : vector<1x256xf32>
    %c4 = arith.constant 4 : index
    %129 = memref.load %arg2[%c4] : memref<98xf32, #tpu.memory_space<smem>>
    %130 = vector.broadcast %129 : f32 to vector<1x256xf32>
    %131 = arith.mulf %107, %130 : vector<1x256xf32>
    %132 = arith.addf %128, %131 : vector<1x256xf32>
    %c5 = arith.constant 5 : index
    %133 = memref.load %arg2[%c5] : memref<98xf32, #tpu.memory_space<smem>>
    %134 = vector.broadcast %133 : f32 to vector<1x256xf32>
    %135 = arith.mulf %110, %134 : vector<1x256xf32>
    %136 = arith.addf %132, %135 : vector<1x256xf32>
    %c6 = arith.constant 6 : index
    %137 = memref.load %arg2[%c6] : memref<98xf32, #tpu.memory_space<smem>>
    %138 = vector.broadcast %137 : f32 to vector<1x256xf32>
    %139 = arith.mulf %113, %138 : vector<1x256xf32>
    %140 = arith.addf %136, %139 : vector<1x256xf32>
    %c48_i32 = arith.constant 48 : i32
    %141 = tpu.dynamic_rotate %140 by %c48_i32 dim 1 : vector<1x256xf32>, i32 -> vector<1x256xf32>
    %cst_52 = arith.constant 0.000000e+00 : f32
    %142 = vector.broadcast %cst_52 : f32 to vector<1x256xf32>
    %143 = arith.select %21, %141, %142 : vector<1x256xi1>, vector<1x256xf32>
    %144 = arith.addf %92, %143 : vector<1x256xf32>
    %c7 = arith.constant 7 : index
    %145 = memref.load %arg2[%c7] : memref<98xf32, #tpu.memory_space<smem>>
    %146 = vector.broadcast %145 : f32 to vector<1x256xf32>
    %147 = arith.mulf %98, %146 : vector<1x256xf32>
    %c8 = arith.constant 8 : index
    %148 = memref.load %arg2[%c8] : memref<98xf32, #tpu.memory_space<smem>>
    %149 = vector.broadcast %148 : f32 to vector<1x256xf32>
    %150 = arith.mulf %101, %149 : vector<1x256xf32>
    %151 = arith.addf %147, %150 : vector<1x256xf32>
    %c9 = arith.constant 9 : index
    %152 = memref.load %arg2[%c9] : memref<98xf32, #tpu.memory_space<smem>>
    %153 = vector.broadcast %152 : f32 to vector<1x256xf32>
    %154 = arith.mulf %104, %153 : vector<1x256xf32>
    %155 = arith.addf %151, %154 : vector<1x256xf32>
    %c10 = arith.constant 10 : index
    %156 = memref.load %arg2[%c10] : memref<98xf32, #tpu.memory_space<smem>>
    %157 = vector.broadcast %156 : f32 to vector<1x256xf32>
    %158 = arith.mulf %5, %157 : vector<1x256xf32>
    %159 = arith.addf %155, %158 : vector<1x256xf32>
    %c11 = arith.constant 11 : index
    %160 = memref.load %arg2[%c11] : memref<98xf32, #tpu.memory_space<smem>>
    %161 = vector.broadcast %160 : f32 to vector<1x256xf32>
    %162 = arith.mulf %107, %161 : vector<1x256xf32>
    %163 = arith.addf %159, %162 : vector<1x256xf32>
    %c12 = arith.constant 12 : index
    %164 = memref.load %arg2[%c12] : memref<98xf32, #tpu.memory_space<smem>>
    %165 = vector.broadcast %164 : f32 to vector<1x256xf32>
    %166 = arith.mulf %110, %165 : vector<1x256xf32>
    %167 = arith.addf %163, %166 : vector<1x256xf32>
    %c13 = arith.constant 13 : index
    %168 = memref.load %arg2[%c13] : memref<98xf32, #tpu.memory_space<smem>>
    %169 = vector.broadcast %168 : f32 to vector<1x256xf32>
    %170 = arith.mulf %113, %169 : vector<1x256xf32>
    %171 = arith.addf %167, %170 : vector<1x256xf32>
    %c32_i32 = arith.constant 32 : i32
    %172 = tpu.dynamic_rotate %171 by %c32_i32 dim 1 : vector<1x256xf32>, i32 -> vector<1x256xf32>
    %cst_53 = arith.constant 0.000000e+00 : f32
    %173 = vector.broadcast %cst_53 : f32 to vector<1x256xf32>
    %174 = arith.select %35, %172, %173 : vector<1x256xi1>, vector<1x256xf32>
    %175 = arith.addf %93, %174 : vector<1x256xf32>
    %c14 = arith.constant 14 : index
    %176 = memref.load %arg2[%c14] : memref<98xf32, #tpu.memory_space<smem>>
    %177 = vector.broadcast %176 : f32 to vector<1x256xf32>
    %178 = arith.mulf %98, %177 : vector<1x256xf32>
    %c15 = arith.constant 15 : index
    %179 = memref.load %arg2[%c15] : memref<98xf32, #tpu.memory_space<smem>>
    %180 = vector.broadcast %179 : f32 to vector<1x256xf32>
    %181 = arith.mulf %101, %180 : vector<1x256xf32>
    %182 = arith.addf %178, %181 : vector<1x256xf32>
    %c16 = arith.constant 16 : index
    %183 = memref.load %arg2[%c16] : memref<98xf32, #tpu.memory_space<smem>>
    %184 = vector.broadcast %183 : f32 to vector<1x256xf32>
    %185 = arith.mulf %104, %184 : vector<1x256xf32>
    %186 = arith.addf %182, %185 : vector<1x256xf32>
    %c17 = arith.constant 17 : index
    %187 = memref.load %arg2[%c17] : memref<98xf32, #tpu.memory_space<smem>>
    %188 = vector.broadcast %187 : f32 to vector<1x256xf32>
    %189 = arith.mulf %5, %188 : vector<1x256xf32>
    %190 = arith.addf %186, %189 : vector<1x256xf32>
    %c18 = arith.constant 18 : index
    %191 = memref.load %arg2[%c18] : memref<98xf32, #tpu.memory_space<smem>>
    %192 = vector.broadcast %191 : f32 to vector<1x256xf32>
    %193 = arith.mulf %107, %192 : vector<1x256xf32>
    %194 = arith.addf %190, %193 : vector<1x256xf32>
    %c19 = arith.constant 19 : index
    %195 = memref.load %arg2[%c19] : memref<98xf32, #tpu.memory_space<smem>>
    %196 = vector.broadcast %195 : f32 to vector<1x256xf32>
    %197 = arith.mulf %110, %196 : vector<1x256xf32>
    %198 = arith.addf %194, %197 : vector<1x256xf32>
    %c20 = arith.constant 20 : index
    %199 = memref.load %arg2[%c20] : memref<98xf32, #tpu.memory_space<smem>>
    %200 = vector.broadcast %199 : f32 to vector<1x256xf32>
    %201 = arith.mulf %113, %200 : vector<1x256xf32>
    %202 = arith.addf %198, %201 : vector<1x256xf32>
    %c16_i32_54 = arith.constant 16 : i32
    %203 = tpu.dynamic_rotate %202 by %c16_i32_54 dim 1 : vector<1x256xf32>, i32 -> vector<1x256xf32>
    %cst_55 = arith.constant 0.000000e+00 : f32
    %204 = vector.broadcast %cst_55 : f32 to vector<1x256xf32>
    %205 = arith.select %49, %203, %204 : vector<1x256xi1>, vector<1x256xf32>
    %206 = arith.addf %94, %205 : vector<1x256xf32>
    %c21 = arith.constant 21 : index
    %207 = memref.load %arg2[%c21] : memref<98xf32, #tpu.memory_space<smem>>
    %208 = vector.broadcast %207 : f32 to vector<1x256xf32>
    %209 = arith.mulf %98, %208 : vector<1x256xf32>
    %c22 = arith.constant 22 : index
    %210 = memref.load %arg2[%c22] : memref<98xf32, #tpu.memory_space<smem>>
    %211 = vector.broadcast %210 : f32 to vector<1x256xf32>
    %212 = arith.mulf %101, %211 : vector<1x256xf32>
    %213 = arith.addf %209, %212 : vector<1x256xf32>
    %c23 = arith.constant 23 : index
    %214 = memref.load %arg2[%c23] : memref<98xf32, #tpu.memory_space<smem>>
    %215 = vector.broadcast %214 : f32 to vector<1x256xf32>
    %216 = arith.mulf %104, %215 : vector<1x256xf32>
    %217 = arith.addf %213, %216 : vector<1x256xf32>
    %c24 = arith.constant 24 : index
    %218 = memref.load %arg2[%c24] : memref<98xf32, #tpu.memory_space<smem>>
    %219 = vector.broadcast %218 : f32 to vector<1x256xf32>
    %220 = arith.mulf %5, %219 : vector<1x256xf32>
    %221 = arith.addf %217, %220 : vector<1x256xf32>
    %c25 = arith.constant 25 : index
    %222 = memref.load %arg2[%c25] : memref<98xf32, #tpu.memory_space<smem>>
    %223 = vector.broadcast %222 : f32 to vector<1x256xf32>
    %224 = arith.mulf %107, %223 : vector<1x256xf32>
    %225 = arith.addf %221, %224 : vector<1x256xf32>
    %c26 = arith.constant 26 : index
    %226 = memref.load %arg2[%c26] : memref<98xf32, #tpu.memory_space<smem>>
    %227 = vector.broadcast %226 : f32 to vector<1x256xf32>
    %228 = arith.mulf %110, %227 : vector<1x256xf32>
    %229 = arith.addf %225, %228 : vector<1x256xf32>
    %c27 = arith.constant 27 : index
    %230 = memref.load %arg2[%c27] : memref<98xf32, #tpu.memory_space<smem>>
    %231 = vector.broadcast %230 : f32 to vector<1x256xf32>
    %232 = arith.mulf %113, %231 : vector<1x256xf32>
    %233 = arith.addf %229, %232 : vector<1x256xf32>
    %234 = arith.addf %95, %233 : vector<1x256xf32>
    %c28 = arith.constant 28 : index
    %235 = memref.load %arg2[%c28] : memref<98xf32, #tpu.memory_space<smem>>
    %236 = vector.broadcast %235 : f32 to vector<1x256xf32>
    %237 = arith.mulf %98, %236 : vector<1x256xf32>
    %c29 = arith.constant 29 : index
    %238 = memref.load %arg2[%c29] : memref<98xf32, #tpu.memory_space<smem>>
    %239 = vector.broadcast %238 : f32 to vector<1x256xf32>
    %240 = arith.mulf %101, %239 : vector<1x256xf32>
    %241 = arith.addf %237, %240 : vector<1x256xf32>
    %c30 = arith.constant 30 : index
    %242 = memref.load %arg2[%c30] : memref<98xf32, #tpu.memory_space<smem>>
    %243 = vector.broadcast %242 : f32 to vector<1x256xf32>
    %244 = arith.mulf %104, %243 : vector<1x256xf32>
    %245 = arith.addf %241, %244 : vector<1x256xf32>
    %c31 = arith.constant 31 : index
    %246 = memref.load %arg2[%c31] : memref<98xf32, #tpu.memory_space<smem>>
    %247 = vector.broadcast %246 : f32 to vector<1x256xf32>
    %248 = arith.mulf %5, %247 : vector<1x256xf32>
    %249 = arith.addf %245, %248 : vector<1x256xf32>
    %c32 = arith.constant 32 : index
    %250 = memref.load %arg2[%c32] : memref<98xf32, #tpu.memory_space<smem>>
    %251 = vector.broadcast %250 : f32 to vector<1x256xf32>
    %252 = arith.mulf %107, %251 : vector<1x256xf32>
    %253 = arith.addf %249, %252 : vector<1x256xf32>
    %c33 = arith.constant 33 : index
    %254 = memref.load %arg2[%c33] : memref<98xf32, #tpu.memory_space<smem>>
    %255 = vector.broadcast %254 : f32 to vector<1x256xf32>
    %256 = arith.mulf %110, %255 : vector<1x256xf32>
    %257 = arith.addf %253, %256 : vector<1x256xf32>
    %c34 = arith.constant 34 : index
    %258 = memref.load %arg2[%c34] : memref<98xf32, #tpu.memory_space<smem>>
    %259 = vector.broadcast %258 : f32 to vector<1x256xf32>
    %260 = arith.mulf %113, %259 : vector<1x256xf32>
    %261 = arith.addf %257, %260 : vector<1x256xf32>
    %c240_i32 = arith.constant 240 : i32
    %262 = tpu.dynamic_rotate %261 by %c240_i32 dim 1 : vector<1x256xf32>, i32 -> vector<1x256xf32>
    %cst_56 = arith.constant 0.000000e+00 : f32
    %263 = vector.broadcast %cst_56 : f32 to vector<1x256xf32>
    %264 = arith.select %63, %262, %263 : vector<1x256xi1>, vector<1x256xf32>
    %265 = arith.addf %144, %264 : vector<1x256xf32>
    %c35 = arith.constant 35 : index
    %266 = memref.load %arg2[%c35] : memref<98xf32, #tpu.memory_space<smem>>
    %267 = vector.broadcast %266 : f32 to vector<1x256xf32>
    %268 = arith.mulf %98, %267 : vector<1x256xf32>
    %c36 = arith.constant 36 : index
    %269 = memref.load %arg2[%c36] : memref<98xf32, #tpu.memory_space<smem>>
    %270 = vector.broadcast %269 : f32 to vector<1x256xf32>
    %271 = arith.mulf %101, %270 : vector<1x256xf32>
    %272 = arith.addf %268, %271 : vector<1x256xf32>
    %c37 = arith.constant 37 : index
    %273 = memref.load %arg2[%c37] : memref<98xf32, #tpu.memory_space<smem>>
    %274 = vector.broadcast %273 : f32 to vector<1x256xf32>
    %275 = arith.mulf %104, %274 : vector<1x256xf32>
    %276 = arith.addf %272, %275 : vector<1x256xf32>
    %c38 = arith.constant 38 : index
    %277 = memref.load %arg2[%c38] : memref<98xf32, #tpu.memory_space<smem>>
    %278 = vector.broadcast %277 : f32 to vector<1x256xf32>
    %279 = arith.mulf %5, %278 : vector<1x256xf32>
    %280 = arith.addf %276, %279 : vector<1x256xf32>
    %c39 = arith.constant 39 : index
    %281 = memref.load %arg2[%c39] : memref<98xf32, #tpu.memory_space<smem>>
    %282 = vector.broadcast %281 : f32 to vector<1x256xf32>
    %283 = arith.mulf %107, %282 : vector<1x256xf32>
    %284 = arith.addf %280, %283 : vector<1x256xf32>
    %c40 = arith.constant 40 : index
    %285 = memref.load %arg2[%c40] : memref<98xf32, #tpu.memory_space<smem>>
    %286 = vector.broadcast %285 : f32 to vector<1x256xf32>
    %287 = arith.mulf %110, %286 : vector<1x256xf32>
    %288 = arith.addf %284, %287 : vector<1x256xf32>
    %c41 = arith.constant 41 : index
    %289 = memref.load %arg2[%c41] : memref<98xf32, #tpu.memory_space<smem>>
    %290 = vector.broadcast %289 : f32 to vector<1x256xf32>
    %291 = arith.mulf %113, %290 : vector<1x256xf32>
    %292 = arith.addf %288, %291 : vector<1x256xf32>
    %c224_i32 = arith.constant 224 : i32
    %293 = tpu.dynamic_rotate %292 by %c224_i32 dim 1 : vector<1x256xf32>, i32 -> vector<1x256xf32>
    %cst_57 = arith.constant 0.000000e+00 : f32
    %294 = vector.broadcast %cst_57 : f32 to vector<1x256xf32>
    %295 = arith.select %77, %293, %294 : vector<1x256xi1>, vector<1x256xf32>
    %296 = arith.addf %175, %295 : vector<1x256xf32>
    %c42 = arith.constant 42 : index
    %297 = memref.load %arg2[%c42] : memref<98xf32, #tpu.memory_space<smem>>
    %298 = vector.broadcast %297 : f32 to vector<1x256xf32>
    %299 = arith.mulf %98, %298 : vector<1x256xf32>
    %c43 = arith.constant 43 : index
    %300 = memref.load %arg2[%c43] : memref<98xf32, #tpu.memory_space<smem>>
    %301 = vector.broadcast %300 : f32 to vector<1x256xf32>
    %302 = arith.mulf %101, %301 : vector<1x256xf32>
    %303 = arith.addf %299, %302 : vector<1x256xf32>
    %c44 = arith.constant 44 : index
    %304 = memref.load %arg2[%c44] : memref<98xf32, #tpu.memory_space<smem>>
    %305 = vector.broadcast %304 : f32 to vector<1x256xf32>
    %306 = arith.mulf %104, %305 : vector<1x256xf32>
    %307 = arith.addf %303, %306 : vector<1x256xf32>
    %c45 = arith.constant 45 : index
    %308 = memref.load %arg2[%c45] : memref<98xf32, #tpu.memory_space<smem>>
    %309 = vector.broadcast %308 : f32 to vector<1x256xf32>
    %310 = arith.mulf %5, %309 : vector<1x256xf32>
    %311 = arith.addf %307, %310 : vector<1x256xf32>
    %c46 = arith.constant 46 : index
    %312 = memref.load %arg2[%c46] : memref<98xf32, #tpu.memory_space<smem>>
    %313 = vector.broadcast %312 : f32 to vector<1x256xf32>
    %314 = arith.mulf %107, %313 : vector<1x256xf32>
    %315 = arith.addf %311, %314 : vector<1x256xf32>
    %c47 = arith.constant 47 : index
    %316 = memref.load %arg2[%c47] : memref<98xf32, #tpu.memory_space<smem>>
    %317 = vector.broadcast %316 : f32 to vector<1x256xf32>
    %318 = arith.mulf %110, %317 : vector<1x256xf32>
    %319 = arith.addf %315, %318 : vector<1x256xf32>
    %c48 = arith.constant 48 : index
    %320 = memref.load %arg2[%c48] : memref<98xf32, #tpu.memory_space<smem>>
    %321 = vector.broadcast %320 : f32 to vector<1x256xf32>
    %322 = arith.mulf %113, %321 : vector<1x256xf32>
    %323 = arith.addf %319, %322 : vector<1x256xf32>
    %c208_i32 = arith.constant 208 : i32
    %324 = tpu.dynamic_rotate %323 by %c208_i32 dim 1 : vector<1x256xf32>, i32 -> vector<1x256xf32>
    %cst_58 = arith.constant 0.000000e+00 : f32
    %325 = vector.broadcast %cst_58 : f32 to vector<1x256xf32>
    %326 = arith.select %91, %324, %325 : vector<1x256xi1>, vector<1x256xf32>
    %327 = arith.addf %206, %326 : vector<1x256xf32>
    %c3_i32_59 = arith.constant 3 : i32
    %328 = tpu.dynamic_rotate %3#1 by %c3_i32_59 dim 1 : vector<1x256xf32>, i32 -> vector<1x256xf32>
    %cst_60 = arith.constant 0.000000e+00 : f32
    %329 = vector.broadcast %cst_60 : f32 to vector<1x256xf32>
    %330 = arith.select %16, %328, %329 : vector<1x256xi1>, vector<1x256xf32>
    %c2_i32_61 = arith.constant 2 : i32
    %331 = tpu.dynamic_rotate %3#1 by %c2_i32_61 dim 1 : vector<1x256xf32>, i32 -> vector<1x256xf32>
    %cst_62 = arith.constant 0.000000e+00 : f32
    %332 = vector.broadcast %cst_62 : f32 to vector<1x256xf32>
    %333 = arith.select %30, %331, %332 : vector<1x256xi1>, vector<1x256xf32>
    %c1_i32_63 = arith.constant 1 : i32
    %334 = tpu.dynamic_rotate %3#1 by %c1_i32_63 dim 1 : vector<1x256xf32>, i32 -> vector<1x256xf32>
    %cst_64 = arith.constant 0.000000e+00 : f32
    %335 = vector.broadcast %cst_64 : f32 to vector<1x256xf32>
    %336 = arith.select %44, %334, %335 : vector<1x256xi1>, vector<1x256xf32>
    %c255_i32_65 = arith.constant 255 : i32
    %337 = tpu.dynamic_rotate %3#1 by %c255_i32_65 dim 1 : vector<1x256xf32>, i32 -> vector<1x256xf32>
    %cst_66 = arith.constant 0.000000e+00 : f32
    %338 = vector.broadcast %cst_66 : f32 to vector<1x256xf32>
    %339 = arith.select %58, %337, %338 : vector<1x256xi1>, vector<1x256xf32>
    %c254_i32_67 = arith.constant 254 : i32
    %340 = tpu.dynamic_rotate %3#1 by %c254_i32_67 dim 1 : vector<1x256xf32>, i32 -> vector<1x256xf32>
    %cst_68 = arith.constant 0.000000e+00 : f32
    %341 = vector.broadcast %cst_68 : f32 to vector<1x256xf32>
    %342 = arith.select %72, %340, %341 : vector<1x256xi1>, vector<1x256xf32>
    %c253_i32_69 = arith.constant 253 : i32
    %343 = tpu.dynamic_rotate %3#1 by %c253_i32_69 dim 1 : vector<1x256xf32>, i32 -> vector<1x256xf32>
    %cst_70 = arith.constant 0.000000e+00 : f32
    %344 = vector.broadcast %cst_70 : f32 to vector<1x256xf32>
    %345 = arith.select %86, %343, %344 : vector<1x256xi1>, vector<1x256xf32>
    %c49 = arith.constant 49 : index
    %346 = memref.load %arg2[%c49] : memref<98xf32, #tpu.memory_space<smem>>
    %347 = vector.broadcast %346 : f32 to vector<1x256xf32>
    %348 = arith.mulf %330, %347 : vector<1x256xf32>
    %c50 = arith.constant 50 : index
    %349 = memref.load %arg2[%c50] : memref<98xf32, #tpu.memory_space<smem>>
    %350 = vector.broadcast %349 : f32 to vector<1x256xf32>
    %351 = arith.mulf %333, %350 : vector<1x256xf32>
    %352 = arith.addf %348, %351 : vector<1x256xf32>
    %c51 = arith.constant 51 : index
    %353 = memref.load %arg2[%c51] : memref<98xf32, #tpu.memory_space<smem>>
    %354 = vector.broadcast %353 : f32 to vector<1x256xf32>
    %355 = arith.mulf %336, %354 : vector<1x256xf32>
    %356 = arith.addf %352, %355 : vector<1x256xf32>
    %c52 = arith.constant 52 : index
    %357 = memref.load %arg2[%c52] : memref<98xf32, #tpu.memory_space<smem>>
    %358 = vector.broadcast %357 : f32 to vector<1x256xf32>
    %359 = arith.mulf %3#1, %358 : vector<1x256xf32>
    %360 = arith.addf %356, %359 : vector<1x256xf32>
    %c53 = arith.constant 53 : index
    %361 = memref.load %arg2[%c53] : memref<98xf32, #tpu.memory_space<smem>>
    %362 = vector.broadcast %361 : f32 to vector<1x256xf32>
    %363 = arith.mulf %339, %362 : vector<1x256xf32>
    %364 = arith.addf %360, %363 : vector<1x256xf32>
    %c54 = arith.constant 54 : index
    %365 = memref.load %arg2[%c54] : memref<98xf32, #tpu.memory_space<smem>>
    %366 = vector.broadcast %365 : f32 to vector<1x256xf32>
    %367 = arith.mulf %342, %366 : vector<1x256xf32>
    %368 = arith.addf %364, %367 : vector<1x256xf32>
    %c55 = arith.constant 55 : index
    %369 = memref.load %arg2[%c55] : memref<98xf32, #tpu.memory_space<smem>>
    %370 = vector.broadcast %369 : f32 to vector<1x256xf32>
    %371 = arith.mulf %345, %370 : vector<1x256xf32>
    %372 = arith.addf %368, %371 : vector<1x256xf32>
    %c48_i32_71 = arith.constant 48 : i32
    %373 = tpu.dynamic_rotate %372 by %c48_i32_71 dim 1 : vector<1x256xf32>, i32 -> vector<1x256xf32>
    %cst_72 = arith.constant 0.000000e+00 : f32
    %374 = vector.broadcast %cst_72 : f32 to vector<1x256xf32>
    %375 = arith.select %21, %373, %374 : vector<1x256xi1>, vector<1x256xf32>
    %376 = arith.addf %234, %375 : vector<1x256xf32>
    %c56 = arith.constant 56 : index
    %377 = memref.load %arg2[%c56] : memref<98xf32, #tpu.memory_space<smem>>
    %378 = vector.broadcast %377 : f32 to vector<1x256xf32>
    %379 = arith.mulf %330, %378 : vector<1x256xf32>
    %c57 = arith.constant 57 : index
    %380 = memref.load %arg2[%c57] : memref<98xf32, #tpu.memory_space<smem>>
    %381 = vector.broadcast %380 : f32 to vector<1x256xf32>
    %382 = arith.mulf %333, %381 : vector<1x256xf32>
    %383 = arith.addf %379, %382 : vector<1x256xf32>
    %c58 = arith.constant 58 : index
    %384 = memref.load %arg2[%c58] : memref<98xf32, #tpu.memory_space<smem>>
    %385 = vector.broadcast %384 : f32 to vector<1x256xf32>
    %386 = arith.mulf %336, %385 : vector<1x256xf32>
    %387 = arith.addf %383, %386 : vector<1x256xf32>
    %c59 = arith.constant 59 : index
    %388 = memref.load %arg2[%c59] : memref<98xf32, #tpu.memory_space<smem>>
    %389 = vector.broadcast %388 : f32 to vector<1x256xf32>
    %390 = arith.mulf %3#1, %389 : vector<1x256xf32>
    %391 = arith.addf %387, %390 : vector<1x256xf32>
    %c60 = arith.constant 60 : index
    %392 = memref.load %arg2[%c60] : memref<98xf32, #tpu.memory_space<smem>>
    %393 = vector.broadcast %392 : f32 to vector<1x256xf32>
    %394 = arith.mulf %339, %393 : vector<1x256xf32>
    %395 = arith.addf %391, %394 : vector<1x256xf32>
    %c61 = arith.constant 61 : index
    %396 = memref.load %arg2[%c61] : memref<98xf32, #tpu.memory_space<smem>>
    %397 = vector.broadcast %396 : f32 to vector<1x256xf32>
    %398 = arith.mulf %342, %397 : vector<1x256xf32>
    %399 = arith.addf %395, %398 : vector<1x256xf32>
    %c62 = arith.constant 62 : index
    %400 = memref.load %arg2[%c62] : memref<98xf32, #tpu.memory_space<smem>>
    %401 = vector.broadcast %400 : f32 to vector<1x256xf32>
    %402 = arith.mulf %345, %401 : vector<1x256xf32>
    %403 = arith.addf %399, %402 : vector<1x256xf32>
    %c32_i32_73 = arith.constant 32 : i32
    %404 = tpu.dynamic_rotate %403 by %c32_i32_73 dim 1 : vector<1x256xf32>, i32 -> vector<1x256xf32>
    %cst_74 = arith.constant 0.000000e+00 : f32
    %405 = vector.broadcast %cst_74 : f32 to vector<1x256xf32>
    %406 = arith.select %35, %404, %405 : vector<1x256xi1>, vector<1x256xf32>
    %407 = arith.addf %265, %406 : vector<1x256xf32>
    %c63 = arith.constant 63 : index
    %408 = memref.load %arg2[%c63] : memref<98xf32, #tpu.memory_space<smem>>
    %409 = vector.broadcast %408 : f32 to vector<1x256xf32>
    %410 = arith.mulf %330, %409 : vector<1x256xf32>
    %c64 = arith.constant 64 : index
    %411 = memref.load %arg2[%c64] : memref<98xf32, #tpu.memory_space<smem>>
    %412 = vector.broadcast %411 : f32 to vector<1x256xf32>
    %413 = arith.mulf %333, %412 : vector<1x256xf32>
    %414 = arith.addf %410, %413 : vector<1x256xf32>
    %c65 = arith.constant 65 : index
    %415 = memref.load %arg2[%c65] : memref<98xf32, #tpu.memory_space<smem>>
    %416 = vector.broadcast %415 : f32 to vector<1x256xf32>
    %417 = arith.mulf %336, %416 : vector<1x256xf32>
    %418 = arith.addf %414, %417 : vector<1x256xf32>
    %c66 = arith.constant 66 : index
    %419 = memref.load %arg2[%c66] : memref<98xf32, #tpu.memory_space<smem>>
    %420 = vector.broadcast %419 : f32 to vector<1x256xf32>
    %421 = arith.mulf %3#1, %420 : vector<1x256xf32>
    %422 = arith.addf %418, %421 : vector<1x256xf32>
    %c67 = arith.constant 67 : index
    %423 = memref.load %arg2[%c67] : memref<98xf32, #tpu.memory_space<smem>>
    %424 = vector.broadcast %423 : f32 to vector<1x256xf32>
    %425 = arith.mulf %339, %424 : vector<1x256xf32>
    %426 = arith.addf %422, %425 : vector<1x256xf32>
    %c68 = arith.constant 68 : index
    %427 = memref.load %arg2[%c68] : memref<98xf32, #tpu.memory_space<smem>>
    %428 = vector.broadcast %427 : f32 to vector<1x256xf32>
    %429 = arith.mulf %342, %428 : vector<1x256xf32>
    %430 = arith.addf %426, %429 : vector<1x256xf32>
    %c69 = arith.constant 69 : index
    %431 = memref.load %arg2[%c69] : memref<98xf32, #tpu.memory_space<smem>>
    %432 = vector.broadcast %431 : f32 to vector<1x256xf32>
    %433 = arith.mulf %345, %432 : vector<1x256xf32>
    %434 = arith.addf %430, %433 : vector<1x256xf32>
    %c16_i32_75 = arith.constant 16 : i32
    %435 = tpu.dynamic_rotate %434 by %c16_i32_75 dim 1 : vector<1x256xf32>, i32 -> vector<1x256xf32>
    %cst_76 = arith.constant 0.000000e+00 : f32
    %436 = vector.broadcast %cst_76 : f32 to vector<1x256xf32>
    %437 = arith.select %49, %435, %436 : vector<1x256xi1>, vector<1x256xf32>
    %438 = arith.addf %296, %437 : vector<1x256xf32>
    %c70 = arith.constant 70 : index
    %439 = memref.load %arg2[%c70] : memref<98xf32, #tpu.memory_space<smem>>
    %440 = vector.broadcast %439 : f32 to vector<1x256xf32>
    %441 = arith.mulf %330, %440 : vector<1x256xf32>
    %c71 = arith.constant 71 : index
    %442 = memref.load %arg2[%c71] : memref<98xf32, #tpu.memory_space<smem>>
    %443 = vector.broadcast %442 : f32 to vector<1x256xf32>
    %444 = arith.mulf %333, %443 : vector<1x256xf32>
    %445 = arith.addf %441, %444 : vector<1x256xf32>
    %c72 = arith.constant 72 : index
    %446 = memref.load %arg2[%c72] : memref<98xf32, #tpu.memory_space<smem>>
    %447 = vector.broadcast %446 : f32 to vector<1x256xf32>
    %448 = arith.mulf %336, %447 : vector<1x256xf32>
    %449 = arith.addf %445, %448 : vector<1x256xf32>
    %c73 = arith.constant 73 : index
    %450 = memref.load %arg2[%c73] : memref<98xf32, #tpu.memory_space<smem>>
    %451 = vector.broadcast %450 : f32 to vector<1x256xf32>
    %452 = arith.mulf %3#1, %451 : vector<1x256xf32>
    %453 = arith.addf %449, %452 : vector<1x256xf32>
    %c74 = arith.constant 74 : index
    %454 = memref.load %arg2[%c74] : memref<98xf32, #tpu.memory_space<smem>>
    %455 = vector.broadcast %454 : f32 to vector<1x256xf32>
    %456 = arith.mulf %339, %455 : vector<1x256xf32>
    %457 = arith.addf %453, %456 : vector<1x256xf32>
    %c75 = arith.constant 75 : index
    %458 = memref.load %arg2[%c75] : memref<98xf32, #tpu.memory_space<smem>>
    %459 = vector.broadcast %458 : f32 to vector<1x256xf32>
    %460 = arith.mulf %342, %459 : vector<1x256xf32>
    %461 = arith.addf %457, %460 : vector<1x256xf32>
    %c76 = arith.constant 76 : index
    %462 = memref.load %arg2[%c76] : memref<98xf32, #tpu.memory_space<smem>>
    %463 = vector.broadcast %462 : f32 to vector<1x256xf32>
    %464 = arith.mulf %345, %463 : vector<1x256xf32>
    %465 = arith.addf %461, %464 : vector<1x256xf32>
    %466 = arith.addf %327, %465 : vector<1x256xf32>
    %c77 = arith.constant 77 : index
    %467 = memref.load %arg2[%c77] : memref<98xf32, #tpu.memory_space<smem>>
    %468 = vector.broadcast %467 : f32 to vector<1x256xf32>
    %469 = arith.mulf %330, %468 : vector<1x256xf32>
    %c78 = arith.constant 78 : index
    %470 = memref.load %arg2[%c78] : memref<98xf32, #tpu.memory_space<smem>>
    %471 = vector.broadcast %470 : f32 to vector<1x256xf32>
    %472 = arith.mulf %333, %471 : vector<1x256xf32>
    %473 = arith.addf %469, %472 : vector<1x256xf32>
    %c79 = arith.constant 79 : index
    %474 = memref.load %arg2[%c79] : memref<98xf32, #tpu.memory_space<smem>>
    %475 = vector.broadcast %474 : f32 to vector<1x256xf32>
    %476 = arith.mulf %336, %475 : vector<1x256xf32>
    %477 = arith.addf %473, %476 : vector<1x256xf32>
    %c80 = arith.constant 80 : index
    %478 = memref.load %arg2[%c80] : memref<98xf32, #tpu.memory_space<smem>>
    %479 = vector.broadcast %478 : f32 to vector<1x256xf32>
    %480 = arith.mulf %3#1, %479 : vector<1x256xf32>
    %481 = arith.addf %477, %480 : vector<1x256xf32>
    %c81 = arith.constant 81 : index
    %482 = memref.load %arg2[%c81] : memref<98xf32, #tpu.memory_space<smem>>
    %483 = vector.broadcast %482 : f32 to vector<1x256xf32>
    %484 = arith.mulf %339, %483 : vector<1x256xf32>
    %485 = arith.addf %481, %484 : vector<1x256xf32>
    %c82 = arith.constant 82 : index
    %486 = memref.load %arg2[%c82] : memref<98xf32, #tpu.memory_space<smem>>
    %487 = vector.broadcast %486 : f32 to vector<1x256xf32>
    %488 = arith.mulf %342, %487 : vector<1x256xf32>
    %489 = arith.addf %485, %488 : vector<1x256xf32>
    %c83 = arith.constant 83 : index
    %490 = memref.load %arg2[%c83] : memref<98xf32, #tpu.memory_space<smem>>
    %491 = vector.broadcast %490 : f32 to vector<1x256xf32>
    %492 = arith.mulf %345, %491 : vector<1x256xf32>
    %493 = arith.addf %489, %492 : vector<1x256xf32>
    %c240_i32_77 = arith.constant 240 : i32
    %494 = tpu.dynamic_rotate %493 by %c240_i32_77 dim 1 : vector<1x256xf32>, i32 -> vector<1x256xf32>
    %cst_78 = arith.constant 0.000000e+00 : f32
    %495 = vector.broadcast %cst_78 : f32 to vector<1x256xf32>
    %496 = arith.select %63, %494, %495 : vector<1x256xi1>, vector<1x256xf32>
    %497 = arith.addf %376, %496 : vector<1x256xf32>
    %c84 = arith.constant 84 : index
    %498 = memref.load %arg2[%c84] : memref<98xf32, #tpu.memory_space<smem>>
    %499 = vector.broadcast %498 : f32 to vector<1x256xf32>
    %500 = arith.mulf %330, %499 : vector<1x256xf32>
    %c85 = arith.constant 85 : index
    %501 = memref.load %arg2[%c85] : memref<98xf32, #tpu.memory_space<smem>>
    %502 = vector.broadcast %501 : f32 to vector<1x256xf32>
    %503 = arith.mulf %333, %502 : vector<1x256xf32>
    %504 = arith.addf %500, %503 : vector<1x256xf32>
    %c86 = arith.constant 86 : index
    %505 = memref.load %arg2[%c86] : memref<98xf32, #tpu.memory_space<smem>>
    %506 = vector.broadcast %505 : f32 to vector<1x256xf32>
    %507 = arith.mulf %336, %506 : vector<1x256xf32>
    %508 = arith.addf %504, %507 : vector<1x256xf32>
    %c87 = arith.constant 87 : index
    %509 = memref.load %arg2[%c87] : memref<98xf32, #tpu.memory_space<smem>>
    %510 = vector.broadcast %509 : f32 to vector<1x256xf32>
    %511 = arith.mulf %3#1, %510 : vector<1x256xf32>
    %512 = arith.addf %508, %511 : vector<1x256xf32>
    %c88 = arith.constant 88 : index
    %513 = memref.load %arg2[%c88] : memref<98xf32, #tpu.memory_space<smem>>
    %514 = vector.broadcast %513 : f32 to vector<1x256xf32>
    %515 = arith.mulf %339, %514 : vector<1x256xf32>
    %516 = arith.addf %512, %515 : vector<1x256xf32>
    %c89 = arith.constant 89 : index
    %517 = memref.load %arg2[%c89] : memref<98xf32, #tpu.memory_space<smem>>
    %518 = vector.broadcast %517 : f32 to vector<1x256xf32>
    %519 = arith.mulf %342, %518 : vector<1x256xf32>
    %520 = arith.addf %516, %519 : vector<1x256xf32>
    %c90 = arith.constant 90 : index
    %521 = memref.load %arg2[%c90] : memref<98xf32, #tpu.memory_space<smem>>
    %522 = vector.broadcast %521 : f32 to vector<1x256xf32>
    %523 = arith.mulf %345, %522 : vector<1x256xf32>
    %524 = arith.addf %520, %523 : vector<1x256xf32>
    %c224_i32_79 = arith.constant 224 : i32
    %525 = tpu.dynamic_rotate %524 by %c224_i32_79 dim 1 : vector<1x256xf32>, i32 -> vector<1x256xf32>
    %cst_80 = arith.constant 0.000000e+00 : f32
    %526 = vector.broadcast %cst_80 : f32 to vector<1x256xf32>
    %527 = arith.select %77, %525, %526 : vector<1x256xi1>, vector<1x256xf32>
    %528 = arith.addf %407, %527 : vector<1x256xf32>
    %c91 = arith.constant 91 : index
    %529 = memref.load %arg2[%c91] : memref<98xf32, #tpu.memory_space<smem>>
    %530 = vector.broadcast %529 : f32 to vector<1x256xf32>
    %531 = arith.mulf %330, %530 : vector<1x256xf32>
    %c92 = arith.constant 92 : index
    %532 = memref.load %arg2[%c92] : memref<98xf32, #tpu.memory_space<smem>>
    %533 = vector.broadcast %532 : f32 to vector<1x256xf32>
    %534 = arith.mulf %333, %533 : vector<1x256xf32>
    %535 = arith.addf %531, %534 : vector<1x256xf32>
    %c93 = arith.constant 93 : index
    %536 = memref.load %arg2[%c93] : memref<98xf32, #tpu.memory_space<smem>>
    %537 = vector.broadcast %536 : f32 to vector<1x256xf32>
    %538 = arith.mulf %336, %537 : vector<1x256xf32>
    %539 = arith.addf %535, %538 : vector<1x256xf32>
    %c94 = arith.constant 94 : index
    %540 = memref.load %arg2[%c94] : memref<98xf32, #tpu.memory_space<smem>>
    %541 = vector.broadcast %540 : f32 to vector<1x256xf32>
    %542 = arith.mulf %3#1, %541 : vector<1x256xf32>
    %543 = arith.addf %539, %542 : vector<1x256xf32>
    %c95 = arith.constant 95 : index
    %544 = memref.load %arg2[%c95] : memref<98xf32, #tpu.memory_space<smem>>
    %545 = vector.broadcast %544 : f32 to vector<1x256xf32>
    %546 = arith.mulf %339, %545 : vector<1x256xf32>
    %547 = arith.addf %543, %546 : vector<1x256xf32>
    %c96 = arith.constant 96 : index
    %548 = memref.load %arg2[%c96] : memref<98xf32, #tpu.memory_space<smem>>
    %549 = vector.broadcast %548 : f32 to vector<1x256xf32>
    %550 = arith.mulf %342, %549 : vector<1x256xf32>
    %551 = arith.addf %547, %550 : vector<1x256xf32>
    %c97 = arith.constant 97 : index
    %552 = memref.load %arg2[%c97] : memref<98xf32, #tpu.memory_space<smem>>
    %553 = vector.broadcast %552 : f32 to vector<1x256xf32>
    %554 = arith.mulf %345, %553 : vector<1x256xf32>
    %555 = arith.addf %551, %554 : vector<1x256xf32>
    %c208_i32_81 = arith.constant 208 : i32
    %556 = tpu.dynamic_rotate %555 by %c208_i32_81 dim 1 : vector<1x256xf32>, i32 -> vector<1x256xf32>
    %cst_82 = arith.constant 0.000000e+00 : f32
    %557 = vector.broadcast %cst_82 : f32 to vector<1x256xf32>
    %558 = arith.select %91, %556, %557 : vector<1x256xi1>, vector<1x256xf32>
    %559 = arith.addf %438, %558 : vector<1x256xf32>
    %560 = arith.addf %528, %559 : vector<1x256xf32>
    %561 = arith.addf %466, %497 : vector<1x256xf32>
    %562 = arith.addf %560, %561 : vector<1x256xf32>
    %cst_83 = arith.constant 0.000000e+00 : f32
    %563 = vector.broadcast %cst_83 : f32 to vector<1x256xf32>
    %564 = arith.subf %563, %562 : vector<1x256xf32>
    %565 = math.exp %564 : vector<1x256xf32>
    %cst_84 = arith.constant 1.000000e+00 : f32
    %566 = vector.broadcast %cst_84 : f32 to vector<1x256xf32>
    %567 = arith.addf %566, %565 : vector<1x256xf32>
    %568 = tpu.reciprocal %567 : vector<1x256xf32> -> vector<1x256xf32>
    %c0_i32_85 = arith.constant 0 : i32
    %c4_i32 = arith.constant 4 : i32
    %569 = arith.addi %c0_i32_85, %c4_i32 : i32
    %c1_i32_86 = arith.constant 1 : i32
    scf.for %arg6 = %c0_i32_85 to %569 step %c1_i32_86  : i32 {
      %c0_88 = arith.constant 0 : index
      %570 = arith.index_cast %arg6 : i32 to index
      %c0_89 = arith.constant 0 : index
      %571 = vector.load %arg1[%c0_88, %570, %c0_89] : memref<1x4x256xf32, #tpu.memory_space<vmem>>, vector<1x1x256xf32>
      %572 = vector.shape_cast %571 : vector<1x1x256xf32> to vector<1x256xf32>
      %573 = arith.mulf %572, %568 : vector<1x256xf32>
      %c0_90 = arith.constant 0 : index
      %574 = arith.index_cast %arg6 : i32 to index
      %c0_91 = arith.constant 0 : index
      %575 = vector.load %arg5[%c0_90, %574, %c0_91] : memref<1x4x256xf32, #tpu.memory_space<vmem>>, vector<1x1x256xf32>
      %576 = vector.shape_cast %575 : vector<1x1x256xf32> to vector<1x256xf32>
      %577 = vector.shape_cast %573 : vector<1x256xf32> to vector<1x1x256xf32>
      tpu.vector_store %arg5[%c0_90, %574, %c0_91], %577 {strides = array<i32>} : memref<1x4x256xf32, #tpu.memory_space<vmem>>, vector<1x1x256xf32>,
    }
    %c4_i32_87 = arith.constant 4 : i32
    return
  }
  func.func @transform_0(%arg0: i32) -> (i32, i32, i32) {
    %c0_i32 = arith.constant 0 : i32
    %c0_i32_0 = arith.constant 0 : i32
    %c0_i32_1 = arith.constant 0 : i32
    return %arg0, %c0_i32, %c0_i32_0 : i32, i32, i32
  }
  func.func @transform_1(%arg0: i32) -> i32 {
    %c0_i32 = arith.constant 0 : i32
    %c0_i32_0 = arith.constant 0 : i32
    return %c0_i32 : i32
  }
  func.func @transform_2(%arg0: i32) -> (i32, i32) {
    %c0_i32 = arith.constant 0 : i32
    %c0_i32_0 = arith.constant 0 : i32
    %c0_i32_1 = arith.constant 0 : i32
    return %c0_i32, %c0_i32_0 : i32, i32
  }
  func.func @transform_3(%arg0: i32) -> (i32, i32) {
    %c0_i32 = arith.constant 0 : i32
    %c0_i32_0 = arith.constant 0 : i32
    %c0_i32_1 = arith.constant 0 : i32
    return %c0_i32, %c0_i32_0 : i32, i32
  }
  func.func @transform_4(%arg0: i32) -> (i32, i32, i32) {
    %c0_i32 = arith.constant 0 : i32
    %c0_i32_0 = arith.constant 0 : i32
    %c0_i32_1 = arith.constant 0 : i32
    return %arg0, %c0_i32, %c0_i32_0 : i32, i32, i32
  }
}

</mosaic_0001>

<llo_original>
// kernel: tpu_custom_call.1
$region0: #{tpu_custom_call.1}
  #allocation0 [shape = 'u32[]', space=smem, size = 0x4, offset = 0x4, fixed_abs, tag = 'smem constant byte address 0x4 - core index']
  #allocation1 [shape = 'u32[144,128]{1,0:T(1,128)}', space=vmem, size = 0x12000, scoped, tag = 'internal scratch']
  %s0 = inlined_call_operand.hbm [shape: f32[2,4,256], index: 0, kind: input, shape index: {}]
  %s1 = inlined_call_operand.vmem [shape: f32[98], index: 1, kind: input, shape index: {}]
  %s2 = inlined_call_operand.vmem [shape: s32[1,256], index: 2, kind: input, shape index: {}]
  %s3 = inlined_call_operand.vmem [shape: s32[1,256], index: 3, kind: input, shape index: {}]
  %s4 = inlined_call_operand.hbm [shape: f32[2,4,256], index: 4, kind: output, shape index: {}]
  %s5 = sld [smem:[#allocation0]]
  $region71: #{tpu_custom_call.1} parent=0
    _
  %s7 = ssub.s32 1, %s5
  %s8 = scalar_select 0, %s7, %s5
  $region1: #{tpu_custom_call.1} parent=0
    #allocation2 [shape = 'u8[8192]{0}', space=vmem, size = 0x2000, scoped, tag = 'input window, operand 0']
    #allocation3 [shape = 's32[2]{0}', space=sflag, size = 0x8, scoped, tag = 'scoped memory for tpu_custom_call.1']
    #allocation4 [shape = 's32[2]{0}', space=sflag, size = 0x8, scoped, tag = 'scoped memory for tpu_custom_call.1']
    #allocation5 [shape = 's32[2]{0}', space=sflag, size = 0x8, scoped, tag = 'scoped memory for tpu_custom_call.1']
    #allocation6 [shape = 'u8[512]{0}', space=smem, size = 0x200, scoped, tag = 'input window, operand 1, single buffered']
    #allocation7 [shape = 'u8[8192]{0}', space=vmem, size = 0x2000, scoped, tag = 'output window, operand 0']
    %9 = vsyncpa [#allocation3], 0
    %s10 = scalar_lea.sflag [#allocation3], 1
    %11 = vsyncpa %s10, 0
    %12 = vsyncpa [#allocation5], 0
    %13 = vsyncpa [#allocation4], 0
    %s14 = scalar_lea.sflag [#allocation4], 1
    %15 = vsyncpa %s14, 0
    loop: start=0, step=1, limit=4
    $region2: #{tpu_custom_call.1} parent=1 // loop_pre_header
      _
    $region3: #{tpu_custom_call.1} parent=1 // loop_header
      %s17 = sphi 0, %s21
      %p18 = scmp.ge.s32.totalorder %s17, 4
      %s27 = sphi 0, %s29
      %s30 = sphi 0, %s27
      %s31 = sphi 0, %s30
      %s47 = sphi 0, %s31
      %s51 = sphi 0, %s51
      %s53 = sphi 0, %s51
      %s54 = sphi 0, %s53
      %s68 = sphi 0, %s54
      %s72 = sphi 0, %s72
      %s74 = sphi 0, %s72
      %s75 = sphi 0, %s74
      %s89 = sphi 0, %s75
      %s93 = sphi 0, %s93
      %s95 = sphi 0, %s93
      %s96 = sphi 0, %s95
      %s110 = sphi 0, %s96
      %s116 = sphi 0, %s118
      %s119 = sphi 0, %s116
      %s120 = sphi 0, %s119
      %s136 = sphi 0, %s120
    $region4: #{tpu_custom_call.1} parent=1 // loop_header_branch
      %20 = sbr.rel (%p18) target = $region8
    $region5: #{tpu_custom_call.1} parent=1 // loop_body
      %s22 = ssub.s32 %s17, 1
      %s23 = ssub.s32 %s17, 2
      %s24 = sadd.s32 %s17, 1
      %s25 = ssub.s32 %s17, %s24
      %p26 = scmp.eq.s32.totalorder %s25, 0
      %s28 = sadd.s32 %s27, 1
      %s29 = scalar_select %p26, %s27, %s28
      %p32 = pneg %p26
      %p33 = scmp.eq.s32.totalorder %s17, 1
      %p34 = por %p32, %p33
      %p35 = scmp.ne.s32.totalorder %s27, %s30
      %p36 = scmp.eq.s32.totalorder %s17, 0
      %p37 = por %p35, %p36
      %p38 = scmp.ne.s32.totalorder %s27, %s30
      %p39 = scmp.eq.s32.totalorder %s22, 1
      %p40 = por %p38, %p39
      %p41 = scmp.ne.s32.totalorder %s30, %s31
      %p42 = scmp.eq.s32.totalorder %s22, 0
      %p43 = por %p41, %p42
      %p44 = scmp.ne.s32.totalorder %s30, %s31
      %p45 = scmp.eq.s32.totalorder %s23, 1
      %p46 = por %p44, %p45
      %p48 = scmp.ne.s32.totalorder %s31, %s47
      %p49 = scmp.eq.s32.totalorder %s23, 0
      %p50 = por %p48, %p49
      %s52 = sadd.s32 %s51, 1
      %p55 = scmp.eq.s32.totalorder %s17, 1
      %p56 = scmp.ne.s32.totalorder %s51, %s53
      %p57 = scmp.eq.s32.totalorder %s17, 0
      %p58 = por %p56, %p57
      %p59 = scmp.ne.s32.totalorder %s51, %s53
      %p60 = scmp.eq.s32.totalorder %s22, 1
      %p61 = por %p59, %p60
      %p62 = scmp.ne.s32.totalorder %s53, %s54
      %p63 = scmp.eq.s32.totalorder %s22, 0
      %p64 = por %p62, %p63
      %p65 = scmp.ne.s32.totalorder %s53, %s54
      %p66 = scmp.eq.s32.totalorder %s23, 1
      %p67 = por %p65, %p66
      %p69 = scmp.ne.s32.totalorder %s54, %s68
      %p70 = scmp.eq.s32.totalorder %s23, 0
      %p71 = por %p69, %p70
      %s73 = sadd.s32 %s72, 1
      %p76 = scmp.eq.s32.totalorder %s17, 1
      %p77 = scmp.ne.s32.totalorder %s72, %s74
      %p78 = scmp.eq.s32.totalorder %s17, 0
      %p79 = por %p77, %p78
      %p80 = scmp.ne.s32.totalorder %s72, %s74
      %p81 = scmp.eq.s32.totalorder %s22, 1
      %p82 = por %p80, %p81
      %p83 = scmp.ne.s32.totalorder %s74, %s75
      %p84 = scmp.eq.s32.totalorder %s22, 0
      %p85 = por %p83, %p84
      %p86 = scmp.ne.s32.totalorder %s74, %s75
      %p87 = scmp.eq.s32.totalorder %s23, 1
      %p88 = por %p86, %p87
      %p90 = scmp.ne.s32.totalorder %s75, %s89
      %p91 = scmp.eq.s32.totalorder %s23, 0
      %p92 = por %p90, %p91
      %s94 = sadd.s32 %s93, 1
      %p97 = scmp.eq.s32.totalorder %s17, 1
      %p98 = scmp.ne.s32.totalorder %s93, %s95
      %p99 = scmp.eq.s32.totalorder %s17, 0
      %p100 = por %p98, %p99
      %p101 = scmp.ne.s32.totalorder %s93, %s95
      %p102 = scmp.eq.s32.totalorder %s22, 1
      %p103 = por %p101, %p102
      %p104 = scmp.ne.s32.totalorder %s95, %s96
      %p105 = scmp.eq.s32.totalorder %s22, 0
      %p106 = por %p104, %p105
      %p107 = scmp.ne.s32.totalorder %s95, %s96
      %p108 = scmp.eq.s32.totalorder %s23, 1
      %p109 = por %p107, %p108
      %p111 = scmp.ne.s32.totalorder %s96, %s110
      %p112 = scmp.eq.s32.totalorder %s23, 0
      %p113 = por %p111, %p112
      %s114 = ssub.s32 %s17, %s24
      %p115 = scmp.eq.s32.totalorder %s114, 0
      %s117 = sadd.s32 %s116, 1
      %s118 = scalar_select %p115, %s116, %s117
      %p121 = pneg %p115
      %p122 = scmp.eq.s32.totalorder %s17, 1
      %p123 = por %p121, %p122
      %p124 = scmp.ne.s32.totalorder %s116, %s119
      %p125 = scmp.eq.s32.totalorder %s17, 0
      %p126 = por %p124, %p125
      %p127 = scmp.ne.s32.totalorder %s116, %s119
      %p128 = scmp.eq.s32.totalorder %s22, 1
      %p129 = por %p127, %p128
      %p130 = scmp.ne.s32.totalorder %s119, %s120
      %p131 = scmp.eq.s32.totalorder %s22, 0
      %p132 = por %p130, %p131
      %p133 = scmp.ne.s32.totalorder %s119, %s120
      %p134 = scmp.eq.s32.totalorder %s23, 1
      %p135 = por %p133, %p134
      %p137 = scmp.ne.s32.totalorder %s120, %s136
      %p138 = scmp.eq.s32.totalorder %s23, 0
      %p139 = por %p137, %p138
      %p140 = scmp.le.s32.totalorder 1, %s17
      %p141 = scmp.lt.s32.totalorder %s17, 3
      %p142 = pnand %p140, %p141
      %p143 = pneg %p142
      // Predicated region
      $region9: #{tpu_custom_call.1} parent=5 // pred_check
        _
      $region10: #{tpu_custom_call.1} parent=5 // pred_check_branch
        %145 = sbr.rel (%p142) target = $region12
      $region11: #{tpu_custom_call.1} parent=5 // pred_region
        %s146 = ssub.s32 %s17, 1
        // Predicated region
        $region13: #{tpu_custom_call.1} parent=11 // pred_check
          %p147 = pneg %p64
        $region14: #{tpu_custom_call.1} parent=11 // pred_check_branch
          %149 = sbr.rel (%p147) target = $region16
        $region15: #{tpu_custom_call.1} parent=11 // pred_region
          %s151 = ssub.s32 16, 16
          %152 = vsyncadd [#allocation5], %s151
          %s154 = sshll.u32 %s1, 4
          %s155 = int_to_ptr.vmem [resolvable:$true] %s154
          %157 = dma.vmem_to_smem %s155, 16, [#allocation6], [#allocation5]
        $region16: #{tpu_custom_call.1} parent=11 // pred_fallthru
          _
        // Predicated region
        $region17: #{tpu_custom_call.1} parent=11 // pred_check
          %p158 = pneg %p85
        $region18: #{tpu_custom_call.1} parent=11 // pred_check_branch
          %160 = sbr.rel (%p158) target = $region20
        $region19: #{tpu_custom_call.1} parent=11 // pred_region
          _
        $region20: #{tpu_custom_call.1} parent=11 // pred_fallthru
          _
        // Predicated region
        $region21: #{tpu_custom_call.1} parent=11 // pred_check
          %p161 = pneg %p106
        $region22: #{tpu_custom_call.1} parent=11 // pred_check_branch
          %163 = sbr.rel (%p161) target = $region24
        $region23: #{tpu_custom_call.1} parent=11 // pred_region
          _
        $region24: #{tpu_custom_call.1} parent=11 // pred_fallthru
          _
      $region12: #{tpu_custom_call.1} parent=5 // pred_fallthru
        _
      %p164 = scmp.lt.s32.totalorder %s17, 2
      // Predicated region
      $region25: #{tpu_custom_call.1} parent=5 // pred_check
        %p165 = pneg %p164
      $region26: #{tpu_custom_call.1} parent=5 // pred_check_branch
        %167 = sbr.rel (%p165) target = $region28
      $region27: #{tpu_custom_call.1} parent=5 // pred_region
        // Predicated region
        $region29: #{tpu_custom_call.1} parent=27 // pred_check
          %p168 = pneg %p37
        $region30: #{tpu_custom_call.1} parent=27 // pred_check_branch
          %170 = sbr.rel (%p168) target = $region32
        $region31: #{tpu_custom_call.1} parent=27 // pred_region
          %s171 = sand.u32 %s27, 1
          %s172 = scalar_lea.sflag [#allocation3], %s171
          %s173 = sand.u32 %s27, 1
          %s174 = smul.addr %s173, 8
          %s175 = scalar_lea.vmem [#allocation2], %s174
          %s177 = ssub.s32 128, 128
          %178 = vsyncadd %s172, %s177
          %s179 = smul.addr %s17, 2
          %s180 = smul.addr %s179, 64
          %s181 = scalar_lea.hbm %s0, %s180
          %s183 = sshll.u32 %s175, 4
          %s184 = int_to_ptr.vmem [resolvable:$true] %s183
          %186 = dma.hbm_to_vmem [thread:$0]  %s181, 128, %s184, %s172
        $region32: #{tpu_custom_call.1} parent=27 // pred_fallthru
          _
      $region28: #{tpu_custom_call.1} parent=5 // pred_fallthru
        _
      %p187 = scmp.le.s32.totalorder 1, %s17
      %p188 = scmp.lt.s32.totalorder %s17, 3
      %p189 = pnand %p187, %p188
      %p190 = pneg %p189
      // Predicated region
      $region33: #{tpu_custom_call.1} parent=5 // pred_check
        _
      $region34: #{tpu_custom_call.1} parent=5 // pred_check_branch
        %192 = sbr.rel (%p189) target = $region36
      $region35: #{tpu_custom_call.1} parent=5 // pred_region
        %s193 = ssub.s32 %s17, 1
        %s194 = sand.u32 %s30, 1
        %s195 = scalar_lea.sflag [#allocation3], %s194
        %s196 = sand.u32 %s30, 1
        %s197 = smul.addr %s196, 8
        %s198 = scalar_lea.vmem [#allocation2], %s197
        // Predicated region
        $region37: #{tpu_custom_call.1} parent=35 // pred_check
          %p199 = pneg %p43
        $region38: #{tpu_custom_call.1} parent=35 // pred_check_branch
          %201 = sbr.rel (%p199) target = $region40
        $region39: #{tpu_custom_call.1} parent=35 // pred_region
          %202 = dma.done %s195, 128
        $region40: #{tpu_custom_call.1} parent=35 // pred_fallthru
          _
        // Predicated region
        $region41: #{tpu_custom_call.1} parent=35 // pred_check
          %p203 = pneg %p64
        $region42: #{tpu_custom_call.1} parent=35 // pred_check_branch
          %205 = sbr.rel (%p203) target = $region44
        $region43: #{tpu_custom_call.1} parent=35 // pred_region
          %206 = dma.done [#allocation5], 16
        $region44: #{tpu_custom_call.1} parent=35 // pred_fallthru
          _
        %207 = sfence
        %s208 = sand.u32 %s30, 1
        %s209 = scalar_lea.sflag [#allocation3], %s208
        %s210 = sand.u32 %s30, 1
        %s211 = smul.addr %s210, 8
        %s212 = scalar_lea.vmem [#allocation2], %s211
        %p213 = pneg %p43
        %p214 = pneg %p40
        %p215 = pneg %p64
        %p216 = pneg %p61
        %p217 = pneg %p85
        %p218 = pneg %p82
        %p219 = pneg %p106
        %p220 = pneg %p103
        %p221 = pneg %p132
        %p222 = pneg %p129
        %s223 = sand.u32 %s119, 1
        %s224 = scalar_lea.sflag [#allocation4], %s223
        %s225 = sand.u32 %s119, 1
        %s226 = smul.addr %s225, 8
        %s227 = scalar_lea.vmem [#allocation7], %s226
        %v228 = vld [vmem:[%s198] ss:$4 sm:$0x3]
        loop: start=1, step=1, limit=4
        $region45: #{tpu_custom_call.1} parent=35 // loop_pre_header
          _
        $region46: #{tpu_custom_call.1} parent=35 // loop_header
          %s230 = sphi 1, %s234
          %p231 = scmp.ge.s32.totalorder %s230, 4
          %v235 = vphi %v228, %v246
          %v236 = vphi %v228, %v247
        $region47: #{tpu_custom_call.1} parent=35 // loop_header_branch
          %233 = sbr.rel (%p231) target = $region51
        $region48: #{tpu_custom_call.1} parent=35 // loop_body
          %s237 = sshra.s32 %s230, 2
          %s238 = sand.u32 %s230, 3
          %s239 = sshra.s32 %s230, 2
          %s240 = sand.u32 %s230, 3
          %s241 = smul.u32 %s237, 2
          %s242 = smul.u32 %s241, 4
          %s243 = sadd.s32 %s242, %s240
          %s244 = scalar_lea.vmem %s198, %s243 [#allocation2]
          %v245 = vld [vmem:[%s244] ss:$4 sm:$0x3]
          %v246 = vadd.f32 %v235, %v245
          %v247 = vmax.f32 %v236, %v245
        $region49: #{tpu_custom_call.1} parent=35 // loop_footer
          %s234 = sadd.s32 1, %s230
        $region50: #{tpu_custom_call.1} parent=35 // loop_footer_branch
          %229 = sbr.rel target = $region46
        $region51: #{tpu_custom_call.1} parent=35 // loop_exit
          _
        %v248 = vmul.f32 %v235, 0.25
        %v249 = vld [vmem:[%s2] sm:$0x3]
        %v250 = vld [vmem:[%s3] sm:$0x3]
        %v251 = vadd.s32 %v249, 4294967293
        %v252 = vadd.s32 %v250, 4294967293
        %vm253 = vcmp.ge.s32.totalorder %v251, 0
        %vm254 = vcmp.lt.s32.totalorder %v251, 16
        %vm255 = vmand %vm253, %vm254
        %vm256 = vcmp.ge.s32.totalorder %v252, 0
        %vm257 = vcmp.lt.s32.totalorder %v252, 16
        %vm258 = vmand %vm256, %vm257
        %v259 = vadd.s32 %v249, 4294967294
        %v260 = vadd.s32 %v250, 4294967294
        %vm261 = vcmp.ge.s32.totalorder %v259, 0
        %vm262 = vcmp.lt.s32.totalorder %v259, 16
        %vm263 = vmand %vm261, %vm262
        %vm264 = vcmp.ge.s32.totalorder %v260, 0
        %vm265 = vcmp.lt.s32.totalorder %v260, 16
        %vm266 = vmand %vm264, %vm265
        %v267 = vadd.s32 %v249, 4294967295
        %v268 = vadd.s32 %v250, 4294967295
        %vm269 = vcmp.ge.s32.totalorder %v267, 0
        %vm270 = vcmp.lt.s32.totalorder %v267, 16
        %vm271 = vmand %vm269, %vm270
        %vm272 = vcmp.ge.s32.totalorder %v268, 0
        %vm273 = vcmp.lt.s32.totalorder %v268, 16
        %vm274 = vmand %vm272, %vm273
        %v275 = vadd.s32 %v249, 1
        %v276 = vadd.s32 %v250, 1
        %vm277 = vcmp.ge.s32.totalorder %v275, 0
        %vm278 = vcmp.lt.s32.totalorder %v275, 16
        %vm279 = vmand %vm277, %vm278
        %vm280 = vcmp.ge.s32.totalorder %v276, 0
        %vm281 = vcmp.lt.s32.totalorder %v276, 16
        %vm282 = vmand %vm280, %vm281
        %v283 = vadd.s32 %v249, 2
        %v284 = vadd.s32 %v250, 2
        %vm285 = vcmp.ge.s32.totalorder %v283, 0
        %vm286 = vcmp.lt.s32.totalorder %v283, 16
        %vm287 = vmand %vm285, %vm286
        %vm288 = vcmp.ge.s32.totalorder %v284, 0
        %vm289 = vcmp.lt.s32.totalorder %v284, 16
        %vm290 = vmand %vm288, %vm289
        %v291 = vadd.s32 %v249, 3
        %v292 = vadd.s32 %v250, 3
        %vm293 = vcmp.ge.s32.totalorder %v291, 0
        %vm294 = vcmp.lt.s32.totalorder %v291, 16
        %vm295 = vmand %vm293, %vm294
        %vm296 = vcmp.ge.s32.totalorder %v292, 0
        %vm297 = vcmp.lt.s32.totalorder %v292, 16
        %vm298 = vmand %vm296, %vm297
        %v300 = vlaneseq
        %v301 = vshrl.u32 %v300, 7
        %v302 = vsub.s32 0, %v301
        %v303 = vrot.slane %v248, %v302
        %v304 = vlaneseq
        %v305 = vshrl.u32 %v304, 7
        %v306 = vsub.s32 1, %v305
        %v307 = vrot.slane %v248, %v306
        %310 = vrot.lane.b32.xlu0 %v303, 3
        %v311 = vpop.permute.xlu0 %310
        %312 = vrot.lane.b32.xlu0 %v307, 3
        %v313 = vpop.permute.xlu0 %312
        %v314 = vlaneseq
        %v315 = vand.u32 %v314, 127
        %vm316 = vcmp.lt.s32.totalorder %v315, 3
        %v317 = vsel %vm316, %v311, %v313
        %v318 = vsel %vm316, %v313, %v311
        %v321 = vcombine.low %v318, %v317
        %v323 = vunpack.c.l.s4 1966171168
        %v324 = vunpack.c.0.s8 %v323
        %v325 = vlaneseq
        %v326 = vshrl.u32 %v325, 7
        %v327 = vsub.s32 %v324, %v326
        %v328 = vrot.slane %v321, %v327
        %v330 = vunpack.c.l.s4 1966171168
        %v331 = vunpack.c.0.s8 %v330
        %v332 = vlaneseq
        %v333 = vshrl.u32 %v332, 7
        %v334 = vsub.s32 %v331, %v333
        %v335 = vrot.slane %v328, %v334
        %v337 = vsel %vm255, %v335, 0.0
        %338 = vrot.lane.b32.xlu0 %v303, 2
        %v339 = vpop.permute.xlu0 %338
        %340 = vrot.lane.b32.xlu0 %v307, 2
        %v341 = vpop.permute.xlu0 %340
        %vm342 = vcmp.lt.s32.totalorder %v315, 2
        %v343 = vsel %vm342, %v339, %v341
        %v344 = vsel %vm342, %v341, %v339
        %v347 = vcombine.low %v344, %v343
        %v349 = vunpack.c.l.s4 1966171168
        %v350 = vunpack.c.0.s8 %v349
        %v351 = vlaneseq
        %v352 = vshrl.u32 %v351, 7
        %v353 = vsub.s32 %v350, %v352
        %v354 = vrot.slane %v347, %v353
        %v356 = vunpack.c.l.s4 1966171168
        %v357 = vunpack.c.0.s8 %v356
        %v358 = vlaneseq
        %v359 = vshrl.u32 %v358, 7
        %v360 = vsub.s32 %v357, %v359
        %v361 = vrot.slane %v354, %v360
        %v363 = vsel %vm263, %v361, 0.0
        %364 = vrot.lane.b32.xlu0 %v303, 1
        %v365 = vpop.permute.xlu0 %364
        %366 = vrot.lane.b32.xlu0 %v307, 1
        %v367 = vpop.permute.xlu0 %366
        %vm368 = vcmp.lt.s32.totalorder %v315, 1
        %v369 = vsel %vm368, %v365, %v367
        %v370 = vsel %vm368, %v367, %v365
        %v373 = vcombine.low %v370, %v369
        %v375 = vunpack.c.l.s4 1966171168
        %v376 = vunpack.c.0.s8 %v375
        %v377 = vlaneseq
        %v378 = vshrl.u32 %v377, 7
        %v379 = vsub.s32 %v376, %v378
        %v380 = vrot.slane %v373, %v379
        %v382 = vunpack.c.l.s4 1966171168
        %v383 = vunpack.c.0.s8 %v382
        %v384 = vlaneseq
        %v385 = vshrl.u32 %v384, 7
        %v386 = vsub.s32 %v383, %v385
        %v387 = vrot.slane %v380, %v386
        %v389 = vsel %vm271, %v387, 0.0
        %390 = vrot.lane.b32.xlu0 %v303, 127
        %v391 = vpop.permute.xlu0 %390
        %392 = vrot.lane.b32.xlu0 %v307, 127
        %v393 = vpop.permute.xlu0 %392
        %vm394 = vcmp.lt.s32.totalorder %v315, 127
        %v395 = vsel %vm394, %v391, %v393
        %v396 = vsel %vm394, %v393, %v391
        %v399 = vcombine.low %v395, %v396
        %v401 = vunpack.c.l.s4 1966171168
        %v402 = vunpack.c.0.s8 %v401
        %v403 = vlaneseq
        %v404 = vshrl.u32 %v403, 7
        %v405 = vsub.s32 %v402, %v404
        %v406 = vrot.slane %v399, %v405
        %v408 = vunpack.c.l.s4 1966171168
        %v409 = vunpack.c.0.s8 %v408
        %v410 = vlaneseq
        %v411 = vshrl.u32 %v410, 7
        %v412 = vsub.s32 %v409, %v411
        %v413 = vrot.slane %v406, %v412
        %v415 = vsel %vm279, %v413, 0.0
        %416 = vrot.lane.b32.xlu0 %v303, 126
        %v417 = vpop.permute.xlu0 %416
        %418 = vrot.lane.b32.xlu0 %v307, 126
        %v419 = vpop.permute.xlu0 %418
        %vm420 = vcmp.lt.s32.totalorder %v315, 126
        %v421 = vsel %vm420, %v417, %v419
        %v422 = vsel %vm420, %v419, %v417
        %v425 = vcombine.low %v421, %v422
        %v427 = vunpack.c.l.s4 1966171168
        %v428 = vunpack.c.0.s8 %v427
        %v429 = vlaneseq
        %v430 = vshrl.u32 %v429, 7
        %v431 = vsub.s32 %v428, %v430
        %v432 = vrot.slane %v425, %v431
        %v434 = vunpack.c.l.s4 1966171168
        %v435 = vunpack.c.0.s8 %v434
        %v436 = vlaneseq
        %v437 = vshrl.u32 %v436, 7
        %v438 = vsub.s32 %v435, %v437
        %v439 = vrot.slane %v432, %v438
        %v441 = vsel %vm287, %v439, 0.0
        %442 = vrot.lane.b32.xlu0 %v303, 125
        %v443 = vpop.permute.xlu0 %442
        %444 = vrot.lane.b32.xlu0 %v307, 125
        %v445 = vpop.permute.xlu0 %444
        %vm446 = vcmp.lt.s32.totalorder %v315, 125
        %v447 = vsel %vm446, %v443, %v445
        %v448 = vsel %vm446, %v445, %v443
        %v451 = vcombine.low %v447, %v448
        %v453 = vunpack.c.l.s4 1966171168
        %v454 = vunpack.c.0.s8 %v453
        %v455 = vlaneseq
        %v456 = vshrl.u32 %v455, 7
        %v457 = vsub.s32 %v454, %v456
        %v458 = vrot.slane %v451, %v457
        %v460 = vunpack.c.l.s4 1966171168
        %v461 = vunpack.c.0.s8 %v460
        %v462 = vlaneseq
        %v463 = vshrl.u32 %v462, 7
        %v464 = vsub.s32 %v461, %v463
        %v465 = vrot.slane %v458, %v464
        %v467 = vsel %vm295, %v465, 0.0
        %s468 = sld [smem:[#allocation6]]
        %v469 = vstv %s468
        %v470 = vmul.f32 %v337, %v469
        %s471 = sld [smem:[#allocation6 + $0x1]]
        %v472 = vstv %s471
        %v473 = vmul.f32 %v363, %v472
        %v474 = vadd.f32 %v470, %v473
        %s475 = sld [smem:[#allocation6 + $0x2]]
        %v476 = vstv %s475
        %v477 = vmul.f32 %v389, %v476
        %v478 = vadd.f32 %v474, %v477
        %s479 = sld [smem:[#allocation6 + $0x3]]
        %v480 = vstv %s479
        %v481 = vmul.f32 %v248, %v480
        %v482 = vadd.f32 %v478, %v481
        %s483 = sld [smem:[#allocation6 + $0x4]]
        %v484 = vstv %s483
        %v485 = vmul.f32 %v415, %v484
        %v486 = vadd.f32 %v482, %v485
        %s487 = sld [smem:[#allocation6 + $0x5]]
        %v488 = vstv %s487
        %v489 = vmul.f32 %v441, %v488
        %v490 = vadd.f32 %v486, %v489
        %s491 = sld [smem:[#allocation6 + $0x6]]
        %v492 = vstv %s491
        %v493 = vmul.f32 %v467, %v492
        %v494 = vadd.f32 %v490, %v493
        %v496 = vlaneseq
        %v497 = vshrl.u32 %v496, 7
        %v498 = vsub.s32 0, %v497
        %v499 = vrot.slane %v494, %v498
        %v500 = vlaneseq
        %v501 = vshrl.u32 %v500, 7
        %v502 = vsub.s32 1, %v501
        %v503 = vrot.slane %v494, %v502
        %506 = vrot.lane.b32.xlu0 %v499, 48
        %v507 = vpop.permute.xlu0 %506
        %508 = vrot.lane.b32.xlu0 %v503, 48
        %v509 = vpop.permute.xlu0 %508
        %vm510 = vcmp.lt.s32.totalorder %v315, 48
        %v511 = vsel %vm510, %v507, %v509
        %v512 = vsel %vm510, %v509, %v507
        %v515 = vcombine.low %v512, %v511
        %v517 = vunpack.c.l.s4 1966171168
        %v518 = vunpack.c.0.s8 %v517
        %v519 = vlaneseq
        %v520 = vshrl.u32 %v519, 7
        %v521 = vsub.s32 %v518, %v520
        %v522 = vrot.slane %v515, %v521
        %v524 = vunpack.c.l.s4 1966171168
        %v525 = vunpack.c.0.s8 %v524
        %v526 = vlaneseq
        %v527 = vshrl.u32 %v526, 7
        %v528 = vsub.s32 %v525, %v527
        %v529 = vrot.slane %v522, %v528
        %v531 = vsel %vm258, %v529, 0.0
        %v532 = vadd.f32 %v531, 0.0
        %s533 = sld [smem:[#allocation6 + $0x7]]
        %v534 = vstv %s533
        %v535 = vmul.f32 %v337, %v534
        %s536 = sld [smem:[#allocation6 + $0x8]]
        %v537 = vstv %s536
        %v538 = vmul.f32 %v363, %v537
        %v539 = vadd.f32 %v535, %v538
        %s540 = sld [smem:[#allocation6 + $0x9]]
        %v541 = vstv %s540
        %v542 = vmul.f32 %v389, %v541
        %v543 = vadd.f32 %v539, %v542
        %s544 = sld [smem:[#allocation6 + $0xa]]
        %v545 = vstv %s544
        %v546 = vmul.f32 %v248, %v545
        %v547 = vadd.f32 %v543, %v546
        %s548 = sld [smem:[#allocation6 + $0xb]]
        %v549 = vstv %s548
        %v550 = vmul.f32 %v415, %v549
        %v551 = vadd.f32 %v547, %v550
        %s552 = sld [smem:[#allocation6 + $0xc]]
        %v553 = vstv %s552
        %v554 = vmul.f32 %v441, %v553
        %v555 = vadd.f32 %v551, %v554
        %s556 = sld [smem:[#allocation6 + $0xd]]
        %v557 = vstv %s556
        %v558 = vmul.f32 %v467, %v557
        %v559 = vadd.f32 %v555, %v558
        %v561 = vlaneseq
        %v562 = vshrl.u32 %v561, 7
        %v563 = vsub.s32 0, %v562
        %v564 = vrot.slane %v559, %v563
        %v565 = vlaneseq
        %v566 = vshrl.u32 %v565, 7
        %v567 = vsub.s32 1, %v566
        %v568 = vrot.slane %v559, %v567
        %571 = vrot.lane.b32.xlu0 %v564, 32
        %v572 = vpop.permute.xlu0 %571
        %573 = vrot.lane.b32.xlu0 %v568, 32
        %v574 = vpop.permute.xlu0 %573
        %vm575 = vcmp.lt.s32.totalorder %v315, 32
        %v576 = vsel %vm575, %v572, %v574
        %v577 = vsel %vm575, %v574, %v572
        %v580 = vcombine.low %v577, %v576
        %v582 = vunpack.c.l.s4 1966171168
        %v583 = vunpack.c.0.s8 %v582
        %v584 = vlaneseq
        %v585 = vshrl.u32 %v584, 7
        %v586 = vsub.s32 %v583, %v585
        %v587 = vrot.slane %v580, %v586
        %v589 = vunpack.c.l.s4 1966171168
        %v590 = vunpack.c.0.s8 %v589
        %v591 = vlaneseq
        %v592 = vshrl.u32 %v591, 7
        %v593 = vsub.s32 %v590, %v592
        %v594 = vrot.slane %v587, %v593
        %v596 = vsel %vm266, %v594, 0.0
        %v597 = vadd.f32 %v596, 0.0
        %s598 = sld [smem:[#allocation6 + $0xe]]
        %v599 = vstv %s598
        %v600 = vmul.f32 %v337, %v599
        %s601 = sld [smem:[#allocation6 + $0xf]]
        %v602 = vstv %s601
        %v603 = vmul.f32 %v363, %v602
        %v604 = vadd.f32 %v600, %v603
        %s605 = sld [smem:[#allocation6 + $0x10]]
        %v606 = vstv %s605
        %v607 = vmul.f32 %v389, %v606
        %v608 = vadd.f32 %v604, %v607
        %s609 = sld [smem:[#allocation6 + $0x11]]
        %v610 = vstv %s609
        %v611 = vmul.f32 %v248, %v610
        %v612 = vadd.f32 %v608, %v611
        %s613 = sld [smem:[#allocation6 + $0x12]]
        %v614 = vstv %s613
        %v615 = vmul.f32 %v415, %v614
        %v616 = vadd.f32 %v612, %v615
        %s617 = sld [smem:[#allocation6 + $0x13]]
        %v618 = vstv %s617
        %v619 = vmul.f32 %v441, %v618
        %v620 = vadd.f32 %v616, %v619
        %s621 = sld [smem:[#allocation6 + $0x14]]
        %v622 = vstv %s621
        %v623 = vmul.f32 %v467, %v622
        %v624 = vadd.f32 %v620, %v623
        %v626 = vlaneseq
        %v627 = vshrl.u32 %v626, 7
        %v628 = vsub.s32 0, %v627
        %v629 = vrot.slane %v624, %v628
        %v630 = vlaneseq
        %v631 = vshrl.u32 %v630, 7
        %v632 = vsub.s32 1, %v631
        %v633 = vrot.slane %v624, %v632
        %636 = vrot.lane.b32.xlu0 %v629, 16
        %v637 = vpop.permute.xlu0 %636
        %638 = vrot.lane.b32.xlu0 %v633, 16
        %v639 = vpop.permute.xlu0 %638
        %vm640 = vcmp.lt.s32.totalorder %v315, 16
        %v641 = vsel %vm640, %v637, %v639
        %v642 = vsel %vm640, %v639, %v637
        %v645 = vcombine.low %v642, %v641
        %v647 = vunpack.c.l.s4 1966171168
        %v648 = vunpack.c.0.s8 %v647
        %v649 = vlaneseq
        %v650 = vshrl.u32 %v649, 7
        %v651 = vsub.s32 %v648, %v650
        %v652 = vrot.slane %v645, %v651
        %v654 = vunpack.c.l.s4 1966171168
        %v655 = vunpack.c.0.s8 %v654
        %v656 = vlaneseq
        %v657 = vshrl.u32 %v656, 7
        %v658 = vsub.s32 %v655, %v657
        %v659 = vrot.slane %v652, %v658
        %v661 = vsel %vm274, %v659, 0.0
        %v662 = vadd.f32 %v661, 0.0
        %s663 = sld [smem:[#allocation6 + $0x15]]
        %v664 = vstv %s663
        %v665 = vmul.f32 %v337, %v664
        %s666 = sld [smem:[#allocation6 + $0x16]]
        %v667 = vstv %s666
        %v668 = vmul.f32 %v363, %v667
        %v669 = vadd.f32 %v665, %v668
        %s670 = sld [smem:[#allocation6 + $0x17]]
        %v671 = vstv %s670
        %v672 = vmul.f32 %v389, %v671
        %v673 = vadd.f32 %v669, %v672
        %s674 = sld [smem:[#allocation6 + $0x18]]
        %v675 = vstv %s674
        %v676 = vmul.f32 %v248, %v675
        %v677 = vadd.f32 %v673, %v676
        %s678 = sld [smem:[#allocation6 + $0x19]]
        %v679 = vstv %s678
        %v680 = vmul.f32 %v415, %v679
        %v681 = vadd.f32 %v677, %v680
        %s682 = sld [smem:[#allocation6 + $0x1a]]
        %v683 = vstv %s682
        %v684 = vmul.f32 %v441, %v683
        %v685 = vadd.f32 %v681, %v684
        %s686 = sld [smem:[#allocation6 + $0x1b]]
        %v687 = vstv %s686
        %v688 = vmul.f32 %v467, %v687
        %v689 = vadd.f32 %v685, %v688
        %v690 = vadd.f32 %v689, 0.0
        %s691 = sld [smem:[#allocation6 + $0x1c]]
        %v692 = vstv %s691
        %v693 = vmul.f32 %v337, %v692
        %s694 = sld [smem:[#allocation6 + $0x1d]]
        %v695 = vstv %s694
        %v696 = vmul.f32 %v363, %v695
        %v697 = vadd.f32 %v693, %v696
        %s698 = sld [smem:[#allocation6 + $0x1e]]
        %v699 = vstv %s698
        %v700 = vmul.f32 %v389, %v699
        %v701 = vadd.f32 %v697, %v700
        %s702 = sld [smem:[#allocation6 + $0x1f]]
        %v703 = vstv %s702
        %v704 = vmul.f32 %v248, %v703
        %v705 = vadd.f32 %v701, %v704
        %s706 = sld [smem:[#allocation6 + $0x20]]
        %v707 = vstv %s706
        %v708 = vmul.f32 %v415, %v707
        %v709 = vadd.f32 %v705, %v708
        %s710 = sld [smem:[#allocation6 + $0x21]]
        %v711 = vstv %s710
        %v712 = vmul.f32 %v441, %v711
        %v713 = vadd.f32 %v709, %v712
        %s714 = sld [smem:[#allocation6 + $0x22]]
        %v715 = vstv %s714
        %v716 = vmul.f32 %v467, %v715
        %v717 = vadd.f32 %v713, %v716
        %v719 = vlaneseq
        %v720 = vshrl.u32 %v719, 7
        %v721 = vsub.s32 0, %v720
        %v722 = vrot.slane %v717, %v721
        %v723 = vlaneseq
        %v724 = vshrl.u32 %v723, 7
        %v725 = vsub.s32 1, %v724
        %v726 = vrot.slane %v717, %v725
        %729 = vrot.lane.b32.xlu0 %v722, 112
        %v730 = vpop.permute.xlu0 %729
        %731 = vrot.lane.b32.xlu0 %v726, 112
        %v732 = vpop.permute.xlu0 %731
        %vm733 = vcmp.lt.s32.totalorder %v315, 112
        %v734 = vsel %vm733, %v730, %v732
        %v735 = vsel %vm733, %v732, %v730
        %v738 = vcombine.low %v734, %v735
        %v740 = vunpack.c.l.s4 1966171168
        %v741 = vunpack.c.0.s8 %v740
        %v742 = vlaneseq
        %v743 = vshrl.u32 %v742, 7
        %v744 = vsub.s32 %v741, %v743
        %v745 = vrot.slane %v738, %v744
        %v747 = vunpack.c.l.s4 1966171168
        %v748 = vunpack.c.0.s8 %v747
        %v749 = vlaneseq
        %v750 = vshrl.u32 %v749, 7
        %v751 = vsub.s32 %v748, %v750
        %v752 = vrot.slane %v745, %v751
        %v754 = vsel %vm282, %v752, 0.0
        %v755 = vadd.f32 %v532, %v754
        %s756 = sld [smem:[#allocation6 + $0x23]]
        %v757 = vstv %s756
        %v758 = vmul.f32 %v337, %v757
        %s759 = sld [smem:[#allocation6 + $0x24]]
        %v760 = vstv %s759
        %v761 = vmul.f32 %v363, %v760
        %v762 = vadd.f32 %v758, %v761
        %s763 = sld [smem:[#allocation6 + $0x25]]
        %v764 = vstv %s763
        %v765 = vmul.f32 %v389, %v764
        %v766 = vadd.f32 %v762, %v765
        %s767 = sld [smem:[#allocation6 + $0x26]]
        %v768 = vstv %s767
        %v769 = vmul.f32 %v248, %v768
        %v770 = vadd.f32 %v766, %v769
        %s771 = sld [smem:[#allocation6 + $0x27]]
        %v772 = vstv %s771
        %v773 = vmul.f32 %v415, %v772
        %v774 = vadd.f32 %v770, %v773
        %s775 = sld [smem:[#allocation6 + $0x28]]
        %v776 = vstv %s775
        %v777 = vmul.f32 %v441, %v776
        %v778 = vadd.f32 %v774, %v777
        %s779 = sld [smem:[#allocation6 + $0x29]]
        %v780 = vstv %s779
        %v781 = vmul.f32 %v467, %v780
        %v782 = vadd.f32 %v778, %v781
        %v784 = vlaneseq
        %v785 = vshrl.u32 %v784, 7
        %v786 = vsub.s32 0, %v785
        %v787 = vrot.slane %v782, %v786
        %v788 = vlaneseq
        %v789 = vshrl.u32 %v788, 7
        %v790 = vsub.s32 1, %v789
        %v791 = vrot.slane %v782, %v790
        %794 = vrot.lane.b32.xlu0 %v787, 96
        %v795 = vpop.permute.xlu0 %794
        %796 = vrot.lane.b32.xlu0 %v791, 96
        %v797 = vpop.permute.xlu0 %796
        %vm798 = vcmp.lt.s32.totalorder %v315, 96
        %v799 = vsel %vm798, %v795, %v797
        %v800 = vsel %vm798, %v797, %v795
        %v803 = vcombine.low %v799, %v800
        %v805 = vunpack.c.l.s4 1966171168
        %v806 = vunpack.c.0.s8 %v805
        %v807 = vlaneseq
        %v808 = vshrl.u32 %v807, 7
        %v809 = vsub.s32 %v806, %v808
        %v810 = vrot.slane %v803, %v809
        %v812 = vunpack.c.l.s4 1966171168
        %v813 = vunpack.c.0.s8 %v812
        %v814 = vlaneseq
        %v815 = vshrl.u32 %v814, 7
        %v816 = vsub.s32 %v813, %v815
        %v817 = vrot.slane %v810, %v816
        %v819 = vsel %vm290, %v817, 0.0
        %v820 = vadd.f32 %v597, %v819
        %s821 = sld [smem:[#allocation6 + $0x2a]]
        %v822 = vstv %s821
        %v823 = vmul.f32 %v337, %v822
        %s824 = sld [smem:[#allocation6 + $0x2b]]
        %v825 = vstv %s824
        %v826 = vmul.f32 %v363, %v825
        %v827 = vadd.f32 %v823, %v826
        %s828 = sld [smem:[#allocation6 + $0x2c]]
        %v829 = vstv %s828
        %v830 = vmul.f32 %v389, %v829
        %v831 = vadd.f32 %v827, %v830
        %s832 = sld [smem:[#allocation6 + $0x2d]]
        %v833 = vstv %s832
        %v834 = vmul.f32 %v248, %v833
        %v835 = vadd.f32 %v831, %v834
        %s836 = sld [smem:[#allocation6 + $0x2e]]
        %v837 = vstv %s836
        %v838 = vmul.f32 %v415, %v837
        %v839 = vadd.f32 %v835, %v838
        %s840 = sld [smem:[#allocation6 + $0x2f]]
        %v841 = vstv %s840
        %v842 = vmul.f32 %v441, %v841
        %v843 = vadd.f32 %v839, %v842
        %s844 = sld [smem:[#allocation6 + $0x30]]
        %v845 = vstv %s844
        %v846 = vmul.f32 %v467, %v845
        %v847 = vadd.f32 %v843, %v846
        %v849 = vlaneseq
        %v850 = vshrl.u32 %v849, 7
        %v851 = vsub.s32 0, %v850
        %v852 = vrot.slane %v847, %v851
        %v853 = vlaneseq
        %v854 = vshrl.u32 %v853, 7
        %v855 = vsub.s32 1, %v854
        %v856 = vrot.slane %v847, %v855
        %859 = vrot.lane.b32.xlu0 %v852, 80
        %v860 = vpop.permute.xlu0 %859
        %861 = vrot.lane.b32.xlu0 %v856, 80
        %v862 = vpop.permute.xlu0 %861
        %vm863 = vcmp.lt.s32.totalorder %v315, 80
        %v864 = vsel %vm863, %v860, %v862
        %v865 = vsel %vm863, %v862, %v860
        %v868 = vcombine.low %v864, %v865
        %v870 = vunpack.c.l.s4 1966171168
        %v871 = vunpack.c.0.s8 %v870
        %v872 = vlaneseq
        %v873 = vshrl.u32 %v872, 7
        %v874 = vsub.s32 %v871, %v873
        %v875 = vrot.slane %v868, %v874
        %v877 = vunpack.c.l.s4 1966171168
        %v878 = vunpack.c.0.s8 %v877
        %v879 = vlaneseq
        %v880 = vshrl.u32 %v879, 7
        %v881 = vsub.s32 %v878, %v880
        %v882 = vrot.slane %v875, %v881
        %v884 = vsel %vm298, %v882, 0.0
        %v885 = vadd.f32 %v662, %v884
        %v887 = vlaneseq
        %v888 = vshrl.u32 %v887, 7
        %v889 = vsub.s32 0, %v888
        %v890 = vrot.slane %v236, %v889
        %v891 = vlaneseq
        %v892 = vshrl.u32 %v891, 7
        %v893 = vsub.s32 1, %v892
        %v894 = vrot.slane %v236, %v893
        %897 = vrot.lane.b32.xlu0 %v890, 3
        %v898 = vpop.permute.xlu0 %897
        %899 = vrot.lane.b32.xlu0 %v894, 3
        %v900 = vpop.permute.xlu0 %899
        %v901 = vsel %vm316, %v898, %v900
        %v902 = vsel %vm316, %v900, %v898
        %v905 = vcombine.low %v902, %v901
        %v907 = vunpack.c.l.s4 1966171168
        %v908 = vunpack.c.0.s8 %v907
        %v909 = vlaneseq
        %v910 = vshrl.u32 %v909, 7
        %v911 = vsub.s32 %v908, %v910
        %v912 = vrot.slane %v905, %v911
        %v914 = vunpack.c.l.s4 1966171168
        %v915 = vunpack.c.0.s8 %v914
        %v916 = vlaneseq
        %v917 = vshrl.u32 %v916, 7
        %v918 = vsub.s32 %v915, %v917
        %v919 = vrot.slane %v912, %v918
        %v921 = vsel %vm255, %v919, 0.0
        %922 = vrot.lane.b32.xlu0 %v890, 2
        %v923 = vpop.permute.xlu0 %922
        %924 = vrot.lane.b32.xlu0 %v894, 2
        %v925 = vpop.permute.xlu0 %924
        %v926 = vsel %vm342, %v923, %v925
        %v927 = vsel %vm342, %v925, %v923
        %v930 = vcombine.low %v927, %v926
        %v932 = vunpack.c.l.s4 1966171168
        %v933 = vunpack.c.0.s8 %v932
        %v934 = vlaneseq
        %v935 = vshrl.u32 %v934, 7
        %v936 = vsub.s32 %v933, %v935
        %v937 = vrot.slane %v930, %v936
        %v939 = vunpack.c.l.s4 1966171168
        %v940 = vunpack.c.0.s8 %v939
        %v941 = vlaneseq
        %v942 = vshrl.u32 %v941, 7
        %v943 = vsub.s32 %v940, %v942
        %v944 = vrot.slane %v937, %v943
        %v946 = vsel %vm263, %v944, 0.0
        %947 = vrot.lane.b32.xlu0 %v890, 1
        %v948 = vpop.permute.xlu0 %947
        %949 = vrot.lane.b32.xlu0 %v894, 1
        %v950 = vpop.permute.xlu0 %949
        %v951 = vsel %vm368, %v948, %v950
        %v952 = vsel %vm368, %v950, %v948
        %v955 = vcombine.low %v952, %v951
        %v957 = vunpack.c.l.s4 1966171168
        %v958 = vunpack.c.0.s8 %v957
        %v959 = vlaneseq
        %v960 = vshrl.u32 %v959, 7
        %v961 = vsub.s32 %v958, %v960
        %v962 = vrot.slane %v955, %v961
        %v964 = vunpack.c.l.s4 1966171168
        %v965 = vunpack.c.0.s8 %v964
        %v966 = vlaneseq
        %v967 = vshrl.u32 %v966, 7
        %v968 = vsub.s32 %v965, %v967
        %v969 = vrot.slane %v962, %v968
        %v971 = vsel %vm271, %v969, 0.0
        %972 = vrot.lane.b32.xlu0 %v890, 127
        %v973 = vpop.permute.xlu0 %972
        %974 = vrot.lane.b32.xlu0 %v894, 127
        %v975 = vpop.permute.xlu0 %974
        %v976 = vsel %vm394, %v973, %v975
        %v977 = vsel %vm394, %v975, %v973
        %v980 = vcombine.low %v976, %v977
        %v982 = vunpack.c.l.s4 1966171168
        %v983 = vunpack.c.0.s8 %v982
        %v984 = vlaneseq
        %v985 = vshrl.u32 %v984, 7
        %v986 = vsub.s32 %v983, %v985
        %v987 = vrot.slane %v980, %v986
        %v989 = vunpack.c.l.s4 1966171168
        %v990 = vunpack.c.0.s8 %v989
        %v991 = vlaneseq
        %v992 = vshrl.u32 %v991, 7
        %v993 = vsub.s32 %v990, %v992
        %v994 = vrot.slane %v987, %v993
        %v996 = vsel %vm279, %v994, 0.0
        %997 = vrot.lane.b32.xlu0 %v890, 126
        %v998 = vpop.permute.xlu0 %997
        %999 = vrot.lane.b32.xlu0 %v894, 126
        %v1000 = vpop.permute.xlu0 %999
        %v1001 = vsel %vm420, %v998, %v1000
        %v1002 = vsel %vm420, %v1000, %v998
        %v1005 = vcombine.low %v1001, %v1002
        %v1007 = vunpack.c.l.s4 1966171168
        %v1008 = vunpack.c.0.s8 %v1007
        %v1009 = vlaneseq
        %v1010 = vshrl.u32 %v1009, 7
        %v1011 = vsub.s32 %v1008, %v1010
        %v1012 = vrot.slane %v1005, %v1011
        %v1014 = vunpack.c.l.s4 1966171168
        %v1015 = vunpack.c.0.s8 %v1014
        %v1016 = vlaneseq
        %v1017 = vshrl.u32 %v1016, 7
        %v1018 = vsub.s32 %v1015, %v1017
        %v1019 = vrot.slane %v1012, %v1018
        %v1021 = vsel %vm287, %v1019, 0.0
        %1022 = vrot.lane.b32.xlu0 %v890, 125
        %v1023 = vpop.permute.xlu0 %1022
        %1024 = vrot.lane.b32.xlu0 %v894, 125
        %v1025 = vpop.permute.xlu0 %1024
        %v1026 = vsel %vm446, %v1023, %v1025
        %v1027 = vsel %vm446, %v1025, %v1023
        %v1030 = vcombine.low %v1026, %v1027
        %v1032 = vunpack.c.l.s4 1966171168
        %v1033 = vunpack.c.0.s8 %v1032
        %v1034 = vlaneseq
        %v1035 = vshrl.u32 %v1034, 7
        %v1036 = vsub.s32 %v1033, %v1035
        %v1037 = vrot.slane %v1030, %v1036
        %v1039 = vunpack.c.l.s4 1966171168
        %v1040 = vunpack.c.0.s8 %v1039
        %v1041 = vlaneseq
        %v1042 = vshrl.u32 %v1041, 7
        %v1043 = vsub.s32 %v1040, %v1042
        %v1044 = vrot.slane %v1037, %v1043
        %v1046 = vsel %vm295, %v1044, 0.0
        %s1047 = sld [smem:[#allocation6 + $0x31]]
        %v1048 = vstv %s1047
        %v1049 = vmul.f32 %v921, %v1048
        %s1050 = sld [smem:[#allocation6 + $0x32]]
        %v1051 = vstv %s1050
        %v1052 = vmul.f32 %v946, %v1051
        %v1053 = vadd.f32 %v1049, %v1052
        %s1054 = sld [smem:[#allocation6 + $0x33]]
        %v1055 = vstv %s1054
        %v1056 = vmul.f32 %v971, %v1055
        %v1057 = vadd.f32 %v1053, %v1056
        %s1058 = sld [smem:[#allocation6 + $0x34]]
        %v1059 = vstv %s1058
        %v1060 = vmul.f32 %v236, %v1059
        %v1061 = vadd.f32 %v1057, %v1060
        %s1062 = sld [smem:[#allocation6 + $0x35]]
        %v1063 = vstv %s1062
        %v1064 = vmul.f32 %v996, %v1063
        %v1065 = vadd.f32 %v1061, %v1064
        %s1066 = sld [smem:[#allocation6 + $0x36]]
        %v1067 = vstv %s1066
        %v1068 = vmul.f32 %v1021, %v1067
        %v1069 = vadd.f32 %v1065, %v1068
        %s1070 = sld [smem:[#allocation6 + $0x37]]
        %v1071 = vstv %s1070
        %v1072 = vmul.f32 %v1046, %v1071
        %v1073 = vadd.f32 %v1069, %v1072
        %v1075 = vlaneseq
        %v1076 = vshrl.u32 %v1075, 7
        %v1077 = vsub.s32 0, %v1076
        %v1078 = vrot.slane %v1073, %v1077
        %v1079 = vlaneseq
        %v1080 = vshrl.u32 %v1079, 7
        %v1081 = vsub.s32 1, %v1080
        %v1082 = vrot.slane %v1073, %v1081
        %1085 = vrot.lane.b32.xlu0 %v1078, 48
        %v1086 = vpop.permute.xlu0 %1085
        %1087 = vrot.lane.b32.xlu0 %v1082, 48
        %v1088 = vpop.permute.xlu0 %1087
        %v1089 = vsel %vm510, %v1086, %v1088
        %v1090 = vsel %vm510, %v1088, %v1086
        %v1093 = vcombine.low %v1090, %v1089
        %v1095 = vunpack.c.l.s4 1966171168
        %v1096 = vunpack.c.0.s8 %v1095
        %v1097 = vlaneseq
        %v1098 = vshrl.u32 %v1097, 7
        %v1099 = vsub.s32 %v1096, %v1098
        %v1100 = vrot.slane %v1093, %v1099
        %v1102 = vunpack.c.l.s4 1966171168
        %v1103 = vunpack.c.0.s8 %v1102
        %v1104 = vlaneseq
        %v1105 = vshrl.u32 %v1104, 7
        %v1106 = vsub.s32 %v1103, %v1105
        %v1107 = vrot.slane %v1100, %v1106
        %v1109 = vsel %vm258, %v1107, 0.0
        %v1110 = vadd.f32 %v690, %v1109
        %s1111 = sld [smem:[#allocation6 + $0x38]]
        %v1112 = vstv %s1111
        %v1113 = vmul.f32 %v921, %v1112
        %s1114 = sld [smem:[#allocation6 + $0x39]]
        %v1115 = vstv %s1114
        %v1116 = vmul.f32 %v946, %v1115
        %v1117 = vadd.f32 %v1113, %v1116
        %s1118 = sld [smem:[#allocation6 + $0x3a]]
        %v1119 = vstv %s1118
        %v1120 = vmul.f32 %v971, %v1119
        %v1121 = vadd.f32 %v1117, %v1120
        %s1122 = sld [smem:[#allocation6 + $0x3b]]
        %v1123 = vstv %s1122
        %v1124 = vmul.f32 %v236, %v1123
        %v1125 = vadd.f32 %v1121, %v1124
        %s1126 = sld [smem:[#allocation6 + $0x3c]]
        %v1127 = vstv %s1126
        %v1128 = vmul.f32 %v996, %v1127
        %v1129 = vadd.f32 %v1125, %v1128
        %s1130 = sld [smem:[#allocation6 + $0x3d]]
        %v1131 = vstv %s1130
        %v1132 = vmul.f32 %v1021, %v1131
        %v1133 = vadd.f32 %v1129, %v1132
        %s1134 = sld [smem:[#allocation6 + $0x3e]]
        %v1135 = vstv %s1134
        %v1136 = vmul.f32 %v1046, %v1135
        %v1137 = vadd.f32 %v1133, %v1136
        %v1139 = vlaneseq
        %v1140 = vshrl.u32 %v1139, 7
        %v1141 = vsub.s32 0, %v1140
        %v1142 = vrot.slane %v1137, %v1141
        %v1143 = vlaneseq
        %v1144 = vshrl.u32 %v1143, 7
        %v1145 = vsub.s32 1, %v1144
        %v1146 = vrot.slane %v1137, %v1145
        %1149 = vrot.lane.b32.xlu0 %v1142, 32
        %v1150 = vpop.permute.xlu0 %1149
        %1151 = vrot.lane.b32.xlu0 %v1146, 32
        %v1152 = vpop.permute.xlu0 %1151
        %v1153 = vsel %vm575, %v1150, %v1152
        %v1154 = vsel %vm575, %v1152, %v1150
        %v1157 = vcombine.low %v1154, %v1153
        %v1159 = vunpack.c.l.s4 1966171168
        %v1160 = vunpack.c.0.s8 %v1159
        %v1161 = vlaneseq
        %v1162 = vshrl.u32 %v1161, 7
        %v1163 = vsub.s32 %v1160, %v1162
        %v1164 = vrot.slane %v1157, %v1163
        %v1166 = vunpack.c.l.s4 1966171168
        %v1167 = vunpack.c.0.s8 %v1166
        %v1168 = vlaneseq
        %v1169 = vshrl.u32 %v1168, 7
        %v1170 = vsub.s32 %v1167, %v1169
        %v1171 = vrot.slane %v1164, %v1170
        %v1173 = vsel %vm266, %v1171, 0.0
        %v1174 = vadd.f32 %v755, %v1173
        %s1175 = sld [smem:[#allocation6 + $0x3f]]
        %v1176 = vstv %s1175
        %v1177 = vmul.f32 %v921, %v1176
        %s1178 = sld [smem:[#allocation6 + $0x40]]
        %v1179 = vstv %s1178
        %v1180 = vmul.f32 %v946, %v1179
        %v1181 = vadd.f32 %v1177, %v1180
        %s1182 = sld [smem:[#allocation6 + $0x41]]
        %v1183 = vstv %s1182
        %v1184 = vmul.f32 %v971, %v1183
        %v1185 = vadd.f32 %v1181, %v1184
        %s1186 = sld [smem:[#allocation6 + $0x42]]
        %v1187 = vstv %s1186
        %v1188 = vmul.f32 %v236, %v1187
        %v1189 = vadd.f32 %v1185, %v1188
        %s1190 = sld [smem:[#allocation6 + $0x43]]
        %v1191 = vstv %s1190
        %v1192 = vmul.f32 %v996, %v1191
        %v1193 = vadd.f32 %v1189, %v1192
        %s1194 = sld [smem:[#allocation6 + $0x44]]
        %v1195 = vstv %s1194
        %v1196 = vmul.f32 %v1021, %v1195
        %v1197 = vadd.f32 %v1193, %v1196
        %s1198 = sld [smem:[#allocation6 + $0x45]]
        %v1199 = vstv %s1198
        %v1200 = vmul.f32 %v1046, %v1199
        %v1201 = vadd.f32 %v1197, %v1200
        %v1203 = vlaneseq
        %v1204 = vshrl.u32 %v1203, 7
        %v1205 = vsub.s32 0, %v1204
        %v1206 = vrot.slane %v1201, %v1205
        %v1207 = vlaneseq
        %v1208 = vshrl.u32 %v1207, 7
        %v1209 = vsub.s32 1, %v1208
        %v1210 = vrot.slane %v1201, %v1209
        %1213 = vrot.lane.b32.xlu0 %v1206, 16
        %v1214 = vpop.permute.xlu0 %1213
        %1215 = vrot.lane.b32.xlu0 %v1210, 16
        %v1216 = vpop.permute.xlu0 %1215
        %v1217 = vsel %vm640, %v1214, %v1216
        %v1218 = vsel %vm640, %v1216, %v1214
        %v1221 = vcombine.low %v1218, %v1217
        %v1223 = vunpack.c.l.s4 1966171168
        %v1224 = vunpack.c.0.s8 %v1223
        %v1225 = vlaneseq
        %v1226 = vshrl.u32 %v1225, 7
        %v1227 = vsub.s32 %v1224, %v1226
        %v1228 = vrot.slane %v1221, %v1227
        %v1230 = vunpack.c.l.s4 1966171168
        %v1231 = vunpack.c.0.s8 %v1230
        %v1232 = vlaneseq
        %v1233 = vshrl.u32 %v1232, 7
        %v1234 = vsub.s32 %v1231, %v1233
        %v1235 = vrot.slane %v1228, %v1234
        %v1237 = vsel %vm274, %v1235, 0.0
        %v1238 = vadd.f32 %v820, %v1237
        %s1239 = sld [smem:[#allocation6 + $0x46]]
        %v1240 = vstv %s1239
        %v1241 = vmul.f32 %v921, %v1240
        %s1242 = sld [smem:[#allocation6 + $0x47]]
        %v1243 = vstv %s1242
        %v1244 = vmul.f32 %v946, %v1243
        %v1245 = vadd.f32 %v1241, %v1244
        %s1246 = sld [smem:[#allocation6 + $0x48]]
        %v1247 = vstv %s1246
        %v1248 = vmul.f32 %v971, %v1247
        %v1249 = vadd.f32 %v1245, %v1248
        %s1250 = sld [smem:[#allocation6 + $0x49]]
        %v1251 = vstv %s1250
        %v1252 = vmul.f32 %v236, %v1251
        %v1253 = vadd.f32 %v1249, %v1252
        %s1254 = sld [smem:[#allocation6 + $0x4a]]
        %v1255 = vstv %s1254
        %v1256 = vmul.f32 %v996, %v1255
        %v1257 = vadd.f32 %v1253, %v1256
        %s1258 = sld [smem:[#allocation6 + $0x4b]]
        %v1259 = vstv %s1258
        %v1260 = vmul.f32 %v1021, %v1259
        %v1261 = vadd.f32 %v1257, %v1260
        %s1262 = sld [smem:[#allocation6 + $0x4c]]
        %v1263 = vstv %s1262
        %v1264 = vmul.f32 %v1046, %v1263
        %v1265 = vadd.f32 %v1261, %v1264
        %v1266 = vadd.f32 %v885, %v1265
        %s1267 = sld [smem:[#allocation6 + $0x4d]]
        %v1268 = vstv %s1267
        %v1269 = vmul.f32 %v921, %v1268
        %s1270 = sld [smem:[#allocation6 + $0x4e]]
        %v1271 = vstv %s1270
        %v1272 = vmul.f32 %v946, %v1271
        %v1273 = vadd.f32 %v1269, %v1272
        %s1274 = sld [smem:[#allocation6 + $0x4f]]
        %v1275 = vstv %s1274
        %v1276 = vmul.f32 %v971, %v1275
        %v1277 = vadd.f32 %v1273, %v1276
        %s1278 = sld [smem:[#allocation6 + $0x50]]
        %v1279 = vstv %s1278
        %v1280 = vmul.f32 %v236, %v1279
        %v1281 = vadd.f32 %v1277, %v1280
        %s1282 = sld [smem:[#allocation6 + $0x51]]
        %v1283 = vstv %s1282
        %v1284 = vmul.f32 %v996, %v1283
        %v1285 = vadd.f32 %v1281, %v1284
        %s1286 = sld [smem:[#allocation6 + $0x52]]
        %v1287 = vstv %s1286
        %v1288 = vmul.f32 %v1021, %v1287
        %v1289 = vadd.f32 %v1285, %v1288
        %s1290 = sld [smem:[#allocation6 + $0x53]]
        %v1291 = vstv %s1290
        %v1292 = vmul.f32 %v1046, %v1291
        %v1293 = vadd.f32 %v1289, %v1292
        %v1295 = vlaneseq
        %v1296 = vshrl.u32 %v1295, 7
        %v1297 = vsub.s32 0, %v1296
        %v1298 = vrot.slane %v1293, %v1297
        %v1299 = vlaneseq
        %v1300 = vshrl.u32 %v1299, 7
        %v1301 = vsub.s32 1, %v1300
        %v1302 = vrot.slane %v1293, %v1301
        %1305 = vrot.lane.b32.xlu0 %v1298, 112
        %v1306 = vpop.permute.xlu0 %1305
        %1307 = vrot.lane.b32.xlu0 %v1302, 112
        %v1308 = vpop.permute.xlu0 %1307
        %v1309 = vsel %vm733, %v1306, %v1308
        %v1310 = vsel %vm733, %v1308, %v1306
        %v1313 = vcombine.low %v1309, %v1310
        %v1315 = vunpack.c.l.s4 1966171168
        %v1316 = vunpack.c.0.s8 %v1315
        %v1317 = vlaneseq
        %v1318 = vshrl.u32 %v1317, 7
        %v1319 = vsub.s32 %v1316, %v1318
        %v1320 = vrot.slane %v1313, %v1319
        %v1322 = vunpack.c.l.s4 1966171168
        %v1323 = vunpack.c.0.s8 %v1322
        %v1324 = vlaneseq
        %v1325 = vshrl.u32 %v1324, 7
        %v1326 = vsub.s32 %v1323, %v1325
        %v1327 = vrot.slane %v1320, %v1326
        %v1329 = vsel %vm282, %v1327, 0.0
        %v1330 = vadd.f32 %v1110, %v1329
        %s1331 = sld [smem:[#allocation6 + $0x54]]
        %v1332 = vstv %s1331
        %v1333 = vmul.f32 %v921, %v1332
        %s1334 = sld [smem:[#allocation6 + $0x55]]
        %v1335 = vstv %s1334
        %v1336 = vmul.f32 %v946, %v1335
        %v1337 = vadd.f32 %v1333, %v1336
        %s1338 = sld [smem:[#allocation6 + $0x56]]
        %v1339 = vstv %s1338
        %v1340 = vmul.f32 %v971, %v1339
        %v1341 = vadd.f32 %v1337, %v1340
        %s1342 = sld [smem:[#allocation6 + $0x57]]
        %v1343 = vstv %s1342
        %v1344 = vmul.f32 %v236, %v1343
        %v1345 = vadd.f32 %v1341, %v1344
        %s1346 = sld [smem:[#allocation6 + $0x58]]
        %v1347 = vstv %s1346
        %v1348 = vmul.f32 %v996, %v1347
        %v1349 = vadd.f32 %v1345, %v1348
        %s1350 = sld [smem:[#allocation6 + $0x59]]
        %v1351 = vstv %s1350
        %v1352 = vmul.f32 %v1021, %v1351
        %v1353 = vadd.f32 %v1349, %v1352
        %s1354 = sld [smem:[#allocation6 + $0x5a]]
        %v1355 = vstv %s1354
        %v1356 = vmul.f32 %v1046, %v1355
        %v1357 = vadd.f32 %v1353, %v1356
        %v1359 = vlaneseq
        %v1360 = vshrl.u32 %v1359, 7
        %v1361 = vsub.s32 0, %v1360
        %v1362 = vrot.slane %v1357, %v1361
        %v1363 = vlaneseq
        %v1364 = vshrl.u32 %v1363, 7
        %v1365 = vsub.s32 1, %v1364
        %v1366 = vrot.slane %v1357, %v1365
        %1369 = vrot.lane.b32.xlu0 %v1362, 96
        %v1370 = vpop.permute.xlu0 %1369
        %1371 = vrot.lane.b32.xlu0 %v1366, 96
        %v1372 = vpop.permute.xlu0 %1371
        %v1373 = vsel %vm798, %v1370, %v1372
        %v1374 = vsel %vm798, %v1372, %v1370
        %v1377 = vcombine.low %v1373, %v1374
        %v1379 = vunpack.c.l.s4 1966171168
        %v1380 = vunpack.c.0.s8 %v1379
        %v1381 = vlaneseq
        %v1382 = vshrl.u32 %v1381, 7
        %v1383 = vsub.s32 %v1380, %v1382
        %v1384 = vrot.slane %v1377, %v1383
        %v1386 = vunpack.c.l.s4 1966171168
        %v1387 = vunpack.c.0.s8 %v1386
        %v1388 = vlaneseq
        %v1389 = vshrl.u32 %v1388, 7
        %v1390 = vsub.s32 %v1387, %v1389
        %v1391 = vrot.slane %v1384, %v1390
        %v1393 = vsel %vm290, %v1391, 0.0
        %v1394 = vadd.f32 %v1174, %v1393
        %s1395 = sld [smem:[#allocation6 + $0x5b]]
        %v1396 = vstv %s1395
        %v1397 = vmul.f32 %v921, %v1396
        %s1398 = sld [smem:[#allocation6 + $0x5c]]
        %v1399 = vstv %s1398
        %v1400 = vmul.f32 %v946, %v1399
        %v1401 = vadd.f32 %v1397, %v1400
        %s1402 = sld [smem:[#allocation6 + $0x5d]]
        %v1403 = vstv %s1402
        %v1404 = vmul.f32 %v971, %v1403
        %v1405 = vadd.f32 %v1401, %v1404
        %s1406 = sld [smem:[#allocation6 + $0x5e]]
        %v1407 = vstv %s1406
        %v1408 = vmul.f32 %v236, %v1407
        %v1409 = vadd.f32 %v1405, %v1408
        %s1410 = sld [smem:[#allocation6 + $0x5f]]
        %v1411 = vstv %s1410
        %v1412 = vmul.f32 %v996, %v1411
        %v1413 = vadd.f32 %v1409, %v1412
        %s1414 = sld [smem:[#allocation6 + $0x60]]
        %v1415 = vstv %s1414
        %v1416 = vmul.f32 %v1021, %v1415
        %v1417 = vadd.f32 %v1413, %v1416
        %s1418 = sld [smem:[#allocation6 + $0x61]]
        %v1419 = vstv %s1418
        %v1420 = vmul.f32 %v1046, %v1419
        %v1421 = vadd.f32 %v1417, %v1420
        %v1423 = vlaneseq
        %v1424 = vshrl.u32 %v1423, 7
        %v1425 = vsub.s32 0, %v1424
        %v1426 = vrot.slane %v1421, %v1425
        %v1427 = vlaneseq
        %v1428 = vshrl.u32 %v1427, 7
        %v1429 = vsub.s32 1, %v1428
        %v1430 = vrot.slane %v1421, %v1429
        %1433 = vrot.lane.b32.xlu0 %v1426, 80
        %v1434 = vpop.permute.xlu0 %1433
        %1435 = vrot.lane.b32.xlu0 %v1430, 80
        %v1436 = vpop.permute.xlu0 %1435
        %v1437 = vsel %vm863, %v1434, %v1436
        %v1438 = vsel %vm863, %v1436, %v1434
        %v1441 = vcombine.low %v1437, %v1438
        %v1443 = vunpack.c.l.s4 1966171168
        %v1444 = vunpack.c.0.s8 %v1443
        %v1445 = vlaneseq
        %v1446 = vshrl.u32 %v1445, 7
        %v1447 = vsub.s32 %v1444, %v1446
        %v1448 = vrot.slane %v1441, %v1447
        %v1450 = vunpack.c.l.s4 1966171168
        %v1451 = vunpack.c.0.s8 %v1450
        %v1452 = vlaneseq
        %v1453 = vshrl.u32 %v1452, 7
        %v1454 = vsub.s32 %v1451, %v1453
        %v1455 = vrot.slane %v1448, %v1454
        %v1457 = vsel %vm298, %v1455, 0.0
        %v1458 = vadd.f32 %v1238, %v1457
        %v1459 = vadd.f32 %v1394, %v1458
        %v1460 = vadd.f32 %v1266, %v1330
        %v1461 = vadd.f32 %v1459, %v1460
        %v1462 = vsub.f32 0.0, %v1461
        %v1463 = vmul.f32 %v1462, 1.442695
        %v1464 = vpow.pop %v1463
        %v1465 = vadd.f32 %v1464, 1.0
        %v1466 = vrcp.pop %v1465
        loop: start=0, step=1, limit=4
        $region52: #{tpu_custom_call.1} parent=35 // loop_pre_header
          _
        $region53: #{tpu_custom_call.1} parent=35 // loop_header
          %s1468 = sphi 0, %s1472
          %p1469 = scmp.ge.s32.totalorder %s1468, 4
        $region54: #{tpu_custom_call.1} parent=35 // loop_header_branch
          %1471 = sbr.rel (%p1469) target = $region58
        $region55: #{tpu_custom_call.1} parent=35 // loop_body
          %s1473 = sshra.s32 %s1468, 2
          %s1474 = sand.u32 %s1468, 3
          %s1475 = sshra.s32 %s1468, 2
          %s1476 = sand.u32 %s1468, 3
          %s1477 = smul.u32 %s1473, 2
          %s1478 = smul.u32 %s1477, 4
          %s1479 = sadd.s32 %s1478, %s1476
          %s1480 = scalar_lea.vmem %s198, %s1479 [#allocation2]
          %v1481 = vld [vmem:[%s1480] ss:$4 sm:$0x3]
          %v1482 = vmul.f32 %v1481, %v1466
          %v1483 = vlaneseq
          %vm1484 = vcmp.ge.s32.totalorder %v1483, 0
          %vm1485 = vcmp.lt.s32.totalorder %v1483, 256
          %vm1486 = vmand %vm1484, %vm1485
          %s1487 = scalar_lea.vmem %s227, %s1479 [#allocation7]
          %1488 = vst.msk [vmem:[%s1487] ss:$4 sm:$0x3] %vm1486, %v1482
        $region56: #{tpu_custom_call.1} parent=35 // loop_footer
          %s1472 = sadd.s32 1, %s1468
        $region57: #{tpu_custom_call.1} parent=35 // loop_footer_branch
          %1467 = sbr.rel target = $region53
        $region58: #{tpu_custom_call.1} parent=35 // loop_exit
          _
        %s1489 = sand.u32 %s119, 1
        %s1490 = scalar_lea.sflag [#allocation4], %s1489
        %s1491 = sand.u32 %s119, 1
        %s1492 = smul.addr %s1491, 8
        %s1493 = scalar_lea.vmem [#allocation7], %s1492
        // Predicated region
        $region59: #{tpu_custom_call.1} parent=35 // pred_check
          %p1494 = pneg %p129
        $region60: #{tpu_custom_call.1} parent=35 // pred_check_branch
          %1496 = sbr.rel (%p1494) target = $region62
        $region61: #{tpu_custom_call.1} parent=35 // pred_region
          %s1498 = ssub.s32 128, 128
          %1499 = vsyncadd %s1490, %s1498
          %s1500 = smul.addr %s22, 2
          %s1501 = smul.addr %s1500, 64
          %s1502 = scalar_lea.hbm %s4, %s1501
          %s1504 = sshll.u32 %s1493, 4
          %s1505 = int_to_ptr.vmem [resolvable:$true] %s1504
          %1507 = dma.vmem_to_hbm [thread:$0]  %s1505, 128, %s1502, %s1490
        $region62: #{tpu_custom_call.1} parent=35 // pred_fallthru
          _
      $region36: #{tpu_custom_call.1} parent=5 // pred_fallthru
        _
      %p1508 = scmp.le.s32.totalorder 2, %s17
      // Predicated region
      $region63: #{tpu_custom_call.1} parent=5 // pred_check
        %p1509 = pneg %p1508
      $region64: #{tpu_custom_call.1} parent=5 // pred_check_branch
        %1511 = sbr.rel (%p1509) target = $region66
      $region65: #{tpu_custom_call.1} parent=5 // pred_region
        %s1512 = ssub.s32 %s17, 2
        // Predicated region
        $region67: #{tpu_custom_call.1} parent=65 // pred_check
          %p1513 = pneg %p135
        $region68: #{tpu_custom_call.1} parent=65 // pred_check_branch
          %1515 = sbr.rel (%p1513) target = $region70
        $region69: #{tpu_custom_call.1} parent=65 // pred_region
          %s1516 = sand.u32 %s120, 1
          %s1517 = scalar_lea.sflag [#allocation4], %s1516
          %s1518 = sand.u32 %s120, 1
          %s1519 = smul.addr %s1518, 8
          %s1520 = scalar_lea.vmem [#allocation7], %s1519
          %1521 = dma.done %s1517, 128
        $region70: #{tpu_custom_call.1} parent=65 // pred_fallthru
          _
      $region66: #{tpu_custom_call.1} parent=5 // pred_fallthru
        _
    $region6: #{tpu_custom_call.1} parent=1 // loop_footer
      %s21 = sadd.s32 1, %s17
    $region7: #{tpu_custom_call.1} parent=1 // loop_footer_branch
      %16 = sbr.rel target = $region3
    $region8: #{tpu_custom_call.1} parent=1 // loop_exit
      _
    %1522 = vsyncpa [#allocation3], 1
    %s1523 = scalar_lea.sflag [#allocation3], 1
    %1524 = vsyncpa %s1523, 1
    %1525 = vsyncpa [#allocation4], 1
    %s1526 = scalar_lea.sflag [#allocation4], 1
    %1527 = vsyncpa %s1526, 1
    %1528 = vsyncpa [#allocation5], 1
    %s1529 = scalar_lea.sflag [#allocation5], 1
    %1530 = vsyncpa %s1529, 1

</llo_original>
